<compile_context>
chip_gen: v7x
topology: tpu7x:2x2x1
jax: 0.10.0
libtpu: 0.0.40
codegen_flags: <defaults>
</compile_context>

<pallas_src>
import functools

import jax
import jax.numpy as jnp
from jax import lax
from jax.experimental import pallas as pl
from jax.experimental.pallas import tpu as pltpu

EPS = 1e-5
LANE = 128


def _round_up(n, m):
    return (n + m - 1) // m * m


def _plan_kernel(offs, x_ref, vec_ref,
                 w1, w2, w3, w4, w5, w6, w7, w8,
                 o_ref):
    def v(name):
        s, n = offs[name]                               # static, 128-aligned
        return vec_ref[:, s:s + n]                      # (1, n) f32

    def lin(h, w_ref, bias_name):
        # bf16 x bf16 -> f32 MXU matmul, f32 bias add.
        return jnp.dot(h.astype(jnp.bfloat16), w_ref[...],
                       preferred_element_type=jnp.float32) + v(bias_name)

    def bn(h, g_name, b_name):
        # PyTorch training-mode BatchNorm1d: batch mean, biased batch variance.
        mu = jnp.mean(h, axis=0, keepdims=True)
        hm = h - mu                                     # reused for var & norm
        var = jnp.mean(hm * hm, axis=0, keepdims=True)
        scale = v(g_name) * lax.rsqrt(var + EPS)        # fused gamma * rsqrt
        return hm * scale + v(b_name)

    h = x_ref[...]                                      # (B, in_pad) f32
    # mlp1: Lin -> ReLU -> Lin
    h = jnp.maximum(lin(h, w1, "b1"), 0.0)
    h = lin(h, w2, "b2")
    # norm1
    h = bn(h, "g1", "be1")
    # mlp2: Lin -> ReLU -> Lin -> ReLU -> Lin
    h = jnp.maximum(lin(h, w3, "b3"), 0.0)
    h = jnp.maximum(lin(h, w4, "b4"), 0.0)
    h = lin(h, w5, "b5")
    # norm2 + activation
    h = jnp.maximum(bn(h, "g2", "be2"), 0.0)
    # mlp3: Lin -> ReLU -> Lin -> ReLU -> Lin
    h = jnp.maximum(lin(h, w6, "b6"), 0.0)
    h = jnp.maximum(lin(h, w7, "b7"), 0.0)
    h = lin(h, w8, "b8")
    o_ref[...] = h.astype(o_ref.dtype)                  # lane-dense (B, out_pad)


def pack_params(params, input_size, out_dim):
    """One-time preprocessing: bf16 weights, lane padding, packed bias/BN vector."""
    (w1, b1, w2, b2, g1, be1, w3, b3, w4, b4, w5, b5,
     g2, be2, w6, b6, w7, b7, w8, b8) = params

    in_pad = _round_up(input_size, LANE)
    out_pad = _round_up(out_dim, LANE)

    w1p = jnp.pad(w1, ((0, in_pad - input_size), (0, 0)))
    w8p = jnp.pad(w8, ((0, 0), (0, out_pad - out_dim)))
    b8p = jnp.pad(b8, ((0, 0), (0, out_pad - out_dim)))
    ws = tuple(w.astype(jnp.bfloat16)
               for w in (w1p, w2, w3, w4, w5, w6, w7, w8p))

    # Pack every (1, N) vector into one lane-concatenated f32 array.  All segment
    # widths are multiples of 128, so every in-kernel slice is lane-aligned.
    segs = [("b1", b1), ("b2", b2), ("g1", g1), ("be1", be1),
            ("b3", b3), ("b4", b4), ("b5", b5),
            ("g2", g2), ("be2", be2),
            ("b6", b6), ("b7", b7), ("b8", b8p)]
    offs, cur = {}, 0
    for name, arr in segs:
        n = arr.shape[-1]
        offs[name] = (cur, n)
        cur += n
    vec = jnp.concatenate(
        [a.astype(jnp.float32).reshape(1, -1) for _, a in segs], axis=1)

    return dict(ws=ws, vec=vec, offs=offs, in_pad=in_pad, out_pad=out_pad,
                out_dim=out_dim, input_size=input_size)


def plan_from_state(x, packed):
    """x: (B, input_size) f32. packed: output of pack_params."""
    B = x.shape[0]
    xp = jnp.pad(x, ((0, 0), (0, packed["in_pad"] - packed["input_size"])))

    kernel = functools.partial(_plan_kernel, packed["offs"])
    out = pl.pallas_call(
        kernel,
        out_shape=jax.ShapeDtypeStruct((B, packed["out_pad"]), jnp.float32),
        # No grid: single invocation, whole operands live in VMEM once
        # (no double-buffering of the 10 inputs).
        compiler_params=pltpu.CompilerParams(
            vmem_limit_bytes=32 * 1024 * 1024),
    )(xp, packed["vec"], *packed["ws"])
    return out[:, :packed["out_dim"]]


def init_params(key, input_size, n_points, dof):
    """Deterministic synthetic params. Linear weights stored (in, out)."""
    out_dim = n_points * dof
    lin_dims = [(input_size, 128), (128, 256),                # mlp1
                (256, 256), (256, 256), (256, 256),           # mlp2
                (256, 256), (256, 256), (256, out_dim)]       # mlp3
    keys = jax.random.split(key, 2 * len(lin_dims) + 4)
    lins = []
    for i, (fin, fout) in enumerate(lin_dims):
        bound = 1.0 / (fin ** 0.5)
        w = jax.random.uniform(keys[2 * i], (fin, fout), jnp.float32, -bound, bound)
        b = jax.random.uniform(keys[2 * i + 1], (1, fout), jnp.float32, -bound, bound)
        lins.append((w, b))
    g1 = 1.0 + 0.1 * jax.random.normal(keys[-4], (1, 256), jnp.float32)
    be1 = 0.1 * jax.random.normal(keys[-3], (1, 256), jnp.float32)
    g2 = 1.0 + 0.1 * jax.random.normal(keys[-2], (1, 256), jnp.float32)
    be2 = 0.1 * jax.random.normal(keys[-1], (1, 256), jnp.float32)
    (w1, b1), (w2, b2), (w3, b3), (w4, b4), (w5, b5), (w6, b6), (w7, b7), (w8, b8) = lins
    return (w1, b1, w2, b2, g1, be1, w3, b3, w4, b4, w5, b5,
            g2, be2, w6, b6, w7, b7, w8, b8)


def reference_forward(x, params):
    """Pure-JAX reference mirroring the kernel numerics
    (bf16 weights/activations at the dot, f32 accumulation & elementwise)."""
    (w1, b1, w2, b2, g1, be1, w3, b3, w4, b4, w5, b5,
     g2, be2, w6, b6, w7, b7, w8, b8) = params

    def lin(h, w, b):
        return jnp.dot(h.astype(jnp.bfloat16), w.astype(jnp.bfloat16),
                       preferred_element_type=jnp.float32) + b

    def bn(h, g, be):
        mu = jnp.mean(h, axis=0, keepdims=True)
        hm = h - mu
        var = jnp.mean(hm * hm, axis=0, keepdims=True)
        return hm * (g * lax.rsqrt(var + EPS)) + be

    h = jnp.maximum(lin(x, w1, b1), 0.0)
    h = lin(h, w2, b2)
    h = bn(h, g1, be1)
    h = jnp.maximum(lin(h, w3, b3), 0.0)
    h = jnp.maximum(lin(h, w4, b4), 0.0)
    h = lin(h, w5, b5)
    h = jnp.maximum(bn(h, g2, be2), 0.0)
    h = jnp.maximum(lin(h, w6, b6), 0.0)
    h = jnp.maximum(lin(h, w7, b7), 0.0)
    return lin(h, w8, b8)


if __name__ == "__main__":
    key = jax.random.PRNGKey(0)
    kx, kp = jax.random.split(key)

    B, input_size, n_points, dof = 64, 32, 8, 4   # small shapes
    out_dim = n_points * dof

    x = jax.random.normal(kx, (B, input_size), jnp.float32)
    params = init_params(kp, input_size, n_points, dof)

    packed = pack_params(params, input_size, out_dim)
    out = jax.block_until_ready(plan_from_state(x, packed))

    ref = reference_forward(x, params)
    assert out.shape == (B, out_dim), out.shape
    err = float(jnp.max(jnp.abs(out - ref)))
    assert jnp.allclose(out, ref, atol=2e-3, rtol=2e-3), err

    print("KERNEL_OK")
</pallas_src>

<mosaic_0001>
module attributes {stable_mosaic.version = 11 : i64} {
  func.func @_plan_kernel(%arg0: memref<64x128xf32, #tpu.memory_space<vmem>>, %arg1: memref<1x2816xf32, #tpu.memory_space<vmem>>, %arg2: memref<128x128xbf16, #tpu.memory_space<vmem>>, %arg3: memref<128x256xbf16, #tpu.memory_space<vmem>>, %arg4: memref<256x256xbf16, #tpu.memory_space<vmem>>, %arg5: memref<256x256xbf16, #tpu.memory_space<vmem>>, %arg6: memref<256x256xbf16, #tpu.memory_space<vmem>>, %arg7: memref<256x256xbf16, #tpu.memory_space<vmem>>, %arg8: memref<256x256xbf16, #tpu.memory_space<vmem>>, %arg9: memref<256x128xbf16, #tpu.memory_space<vmem>>, %arg10: memref<64x128xf32, #tpu.memory_space<vmem>>) attributes {dimension_semantics = [], scalar_prefetch = 0 : i64, scratch_operands = 0 : i64, tpu.core_type = #tpu.core_type<tc>} {
    %c0 = arith.constant 0 : index
    %c0_0 = arith.constant 0 : index
    %0 = vector.load %arg0[%c0, %c0_0] : memref<64x128xf32, #tpu.memory_space<vmem>>, vector<64x128xf32>
    %1 = arith.truncf %0 : vector<64x128xf32> to vector<64x128xbf16>
    %c0_1 = arith.constant 0 : index
    %c0_2 = arith.constant 0 : index
    %2 = vector.load %arg2[%c0_1, %c0_2] : memref<128x128xbf16, #tpu.memory_space<vmem>>, vector<128x128xbf16>
    %cst = arith.constant dense<0.000000e+00> : vector<64x128xf32>
    %3 = tpu.matmul %1, %2, %cst {dimension_numbers = #tpu.dot_dimension_numbers<[1], [0], [0], [1], [0, 0, 1, 1], [], []>} : vector<64x128xbf16>, vector<128x128xbf16>, vector<64x128xf32> -> vector<64x128xf32>
    %c0_3 = arith.constant 0 : index
    %c0_4 = arith.constant 0 : index
    %4 = vector.load %arg1[%c0_3, %c0_4] : memref<1x2816xf32, #tpu.memory_space<vmem>>, vector<1x128xf32>
    %5 = vector.broadcast %4 : vector<1x128xf32> to vector<64x128xf32>
    %6 = arith.addf %3, %5 : vector<64x128xf32>
    %cst_5 = arith.constant 0.000000e+00 : f32
    %7 = vector.broadcast %cst_5 : f32 to vector<64x128xf32>
    %8 = arith.maximumf %6, %7 : vector<64x128xf32>
    %9 = arith.truncf %8 : vector<64x128xf32> to vector<64x128xbf16>
    %c0_6 = arith.constant 0 : index
    %c0_7 = arith.constant 0 : index
    %10 = vector.load %arg3[%c0_6, %c0_7] : memref<128x256xbf16, #tpu.memory_space<vmem>>, vector<128x256xbf16>
    %cst_8 = arith.constant dense<0.000000e+00> : vector<64x256xf32>
    %11 = tpu.matmul %9, %10, %cst_8 {dimension_numbers = #tpu.dot_dimension_numbers<[1], [0], [0], [1], [0, 0, 1, 1], [], []>} : vector<64x128xbf16>, vector<128x256xbf16>, vector<64x256xf32> -> vector<64x256xf32>
    %c0_9 = arith.constant 0 : index
    %c128 = arith.constant 128 : index
    %12 = vector.load %arg1[%c0_9, %c128] : memref<1x2816xf32, #tpu.memory_space<vmem>>, vector<1x256xf32>
    %13 = vector.broadcast %12 : vector<1x256xf32> to vector<64x256xf32>
    %14 = arith.addf %11, %13 : vector<64x256xf32>
    %cst_10 = arith.constant dense<0.000000e+00> : vector<256xf32>
    %15 = vector.multi_reduction <add>, %14, %cst_10 [0] : vector<64x256xf32> to vector<256xf32>
    %16 = vector.shape_cast %15 : vector<256xf32> to vector<1x256xf32>
    %cst_11 = arith.constant 6.400000e+01 : f32
    %17 = vector.broadcast %cst_11 : f32 to vector<1x256xf32>
    %18 = arith.divf %16, %17 : vector<1x256xf32>
    %19 = vector.broadcast %18 : vector<1x256xf32> to vector<64x256xf32>
    %20 = arith.subf %14, %19 : vector<64x256xf32>
    %21 = arith.mulf %20, %20 : vector<64x256xf32>
    %cst_12 = arith.constant dense<0.000000e+00> : vector<256xf32>
    %22 = vector.multi_reduction <add>, %21, %cst_12 [0] : vector<64x256xf32> to vector<256xf32>
    %23 = vector.shape_cast %22 : vector<256xf32> to vector<1x256xf32>
    %cst_13 = arith.constant 6.400000e+01 : f32
    %24 = vector.broadcast %cst_13 : f32 to vector<1x256xf32>
    %25 = arith.divf %23, %24 : vector<1x256xf32>
    %c0_14 = arith.constant 0 : index
    %c384 = arith.constant 384 : index
    %26 = vector.load %arg1[%c0_14, %c384] : memref<1x2816xf32, #tpu.memory_space<vmem>>, vector<1x256xf32>
    %cst_15 = arith.constant 9.99999974E-6 : f32
    %27 = vector.broadcast %cst_15 : f32 to vector<1x256xf32>
    %28 = arith.addf %25, %27 : vector<1x256xf32>
    %29 = math.rsqrt %28 : vector<1x256xf32>
    %30 = arith.mulf %26, %29 : vector<1x256xf32>
    %31 = vector.broadcast %30 : vector<1x256xf32> to vector<64x256xf32>
    %32 = arith.mulf %20, %31 : vector<64x256xf32>
    %c0_16 = arith.constant 0 : index
    %c640 = arith.constant 640 : index
    %33 = vector.load %arg1[%c0_16, %c640] : memref<1x2816xf32, #tpu.memory_space<vmem>>, vector<1x256xf32>
    %34 = vector.broadcast %33 : vector<1x256xf32> to vector<64x256xf32>
    %35 = arith.addf %32, %34 : vector<64x256xf32>
    %36 = arith.truncf %35 : vector<64x256xf32> to vector<64x256xbf16>
    %c0_17 = arith.constant 0 : index
    %c0_18 = arith.constant 0 : index
    %37 = vector.load %arg4[%c0_17, %c0_18] : memref<256x256xbf16, #tpu.memory_space<vmem>>, vector<256x256xbf16>
    %cst_19 = arith.constant dense<0.000000e+00> : vector<64x256xf32>
    %38 = tpu.matmul %36, %37, %cst_19 {dimension_numbers = #tpu.dot_dimension_numbers<[1], [0], [0], [1], [0, 0, 1, 1], [], []>} : vector<64x256xbf16>, vector<256x256xbf16>, vector<64x256xf32> -> vector<64x256xf32>
    %c0_20 = arith.constant 0 : index
    %c896 = arith.constant 896 : index
    %39 = vector.load %arg1[%c0_20, %c896] : memref<1x2816xf32, #tpu.memory_space<vmem>>, vector<1x256xf32>
    %40 = vector.broadcast %39 : vector<1x256xf32> to vector<64x256xf32>
    %41 = arith.addf %38, %40 : vector<64x256xf32>
    %cst_21 = arith.constant 0.000000e+00 : f32
    %42 = vector.broadcast %cst_21 : f32 to vector<64x256xf32>
    %43 = arith.maximumf %41, %42 : vector<64x256xf32>
    %44 = arith.truncf %43 : vector<64x256xf32> to vector<64x256xbf16>
    %c0_22 = arith.constant 0 : index
    %c0_23 = arith.constant 0 : index
    %45 = vector.load %arg5[%c0_22, %c0_23] : memref<256x256xbf16, #tpu.memory_space<vmem>>, vector<256x256xbf16>
    %cst_24 = arith.constant dense<0.000000e+00> : vector<64x256xf32>
    %46 = tpu.matmul %44, %45, %cst_24 {dimension_numbers = #tpu.dot_dimension_numbers<[1], [0], [0], [1], [0, 0, 1, 1], [], []>} : vector<64x256xbf16>, vector<256x256xbf16>, vector<64x256xf32> -> vector<64x256xf32>
    %c0_25 = arith.constant 0 : index
    %c1152 = arith.constant 1152 : index
    %47 = vector.load %arg1[%c0_25, %c1152] : memref<1x2816xf32, #tpu.memory_space<vmem>>, vector<1x256xf32>
    %48 = vector.broadcast %47 : vector<1x256xf32> to vector<64x256xf32>
    %49 = arith.addf %46, %48 : vector<64x256xf32>
    %cst_26 = arith.constant 0.000000e+00 : f32
    %50 = vector.broadcast %cst_26 : f32 to vector<64x256xf32>
    %51 = arith.maximumf %49, %50 : vector<64x256xf32>
    %52 = arith.truncf %51 : vector<64x256xf32> to vector<64x256xbf16>
    %c0_27 = arith.constant 0 : index
    %c0_28 = arith.constant 0 : index
    %53 = vector.load %arg6[%c0_27, %c0_28] : memref<256x256xbf16, #tpu.memory_space<vmem>>, vector<256x256xbf16>
    %cst_29 = arith.constant dense<0.000000e+00> : vector<64x256xf32>
    %54 = tpu.matmul %52, %53, %cst_29 {dimension_numbers = #tpu.dot_dimension_numbers<[1], [0], [0], [1], [0, 0, 1, 1], [], []>} : vector<64x256xbf16>, vector<256x256xbf16>, vector<64x256xf32> -> vector<64x256xf32>
    %c0_30 = arith.constant 0 : index
    %c1408 = arith.constant 1408 : index
    %55 = vector.load %arg1[%c0_30, %c1408] : memref<1x2816xf32, #tpu.memory_space<vmem>>, vector<1x256xf32>
    %56 = vector.broadcast %55 : vector<1x256xf32> to vector<64x256xf32>
    %57 = arith.addf %54, %56 : vector<64x256xf32>
    %cst_31 = arith.constant dense<0.000000e+00> : vector<256xf32>
    %58 = vector.multi_reduction <add>, %57, %cst_31 [0] : vector<64x256xf32> to vector<256xf32>
    %59 = vector.shape_cast %58 : vector<256xf32> to vector<1x256xf32>
    %cst_32 = arith.constant 6.400000e+01 : f32
    %60 = vector.broadcast %cst_32 : f32 to vector<1x256xf32>
    %61 = arith.divf %59, %60 : vector<1x256xf32>
    %62 = vector.broadcast %61 : vector<1x256xf32> to vector<64x256xf32>
    %63 = arith.subf %57, %62 : vector<64x256xf32>
    %64 = arith.mulf %63, %63 : vector<64x256xf32>
    %cst_33 = arith.constant dense<0.000000e+00> : vector<256xf32>
    %65 = vector.multi_reduction <add>, %64, %cst_33 [0] : vector<64x256xf32> to vector<256xf32>
    %66 = vector.shape_cast %65 : vector<256xf32> to vector<1x256xf32>
    %cst_34 = arith.constant 6.400000e+01 : f32
    %67 = vector.broadcast %cst_34 : f32 to vector<1x256xf32>
    %68 = arith.divf %66, %67 : vector<1x256xf32>
    %c0_35 = arith.constant 0 : index
    %c1664 = arith.constant 1664 : index
    %69 = vector.load %arg1[%c0_35, %c1664] : memref<1x2816xf32, #tpu.memory_space<vmem>>, vector<1x256xf32>
    %cst_36 = arith.constant 9.99999974E-6 : f32
    %70 = vector.broadcast %cst_36 : f32 to vector<1x256xf32>
    %71 = arith.addf %68, %70 : vector<1x256xf32>
    %72 = math.rsqrt %71 : vector<1x256xf32>
    %73 = arith.mulf %69, %72 : vector<1x256xf32>
    %74 = vector.broadcast %73 : vector<1x256xf32> to vector<64x256xf32>
    %75 = arith.mulf %63, %74 : vector<64x256xf32>
    %c0_37 = arith.constant 0 : index
    %c1920 = arith.constant 1920 : index
    %76 = vector.load %arg1[%c0_37, %c1920] : memref<1x2816xf32, #tpu.memory_space<vmem>>, vector<1x256xf32>
    %77 = vector.broadcast %76 : vector<1x256xf32> to vector<64x256xf32>
    %78 = arith.addf %75, %77 : vector<64x256xf32>
    %cst_38 = arith.constant 0.000000e+00 : f32
    %79 = vector.broadcast %cst_38 : f32 to vector<64x256xf32>
    %80 = arith.maximumf %78, %79 : vector<64x256xf32>
    %81 = arith.truncf %80 : vector<64x256xf32> to vector<64x256xbf16>
    %c0_39 = arith.constant 0 : index
    %c0_40 = arith.constant 0 : index
    %82 = vector.load %arg7[%c0_39, %c0_40] : memref<256x256xbf16, #tpu.memory_space<vmem>>, vector<256x256xbf16>
    %cst_41 = arith.constant dense<0.000000e+00> : vector<64x256xf32>
    %83 = tpu.matmul %81, %82, %cst_41 {dimension_numbers = #tpu.dot_dimension_numbers<[1], [0], [0], [1], [0, 0, 1, 1], [], []>} : vector<64x256xbf16>, vector<256x256xbf16>, vector<64x256xf32> -> vector<64x256xf32>
    %c0_42 = arith.constant 0 : index
    %c2176 = arith.constant 2176 : index
    %84 = vector.load %arg1[%c0_42, %c2176] : memref<1x2816xf32, #tpu.memory_space<vmem>>, vector<1x256xf32>
    %85 = vector.broadcast %84 : vector<1x256xf32> to vector<64x256xf32>
    %86 = arith.addf %83, %85 : vector<64x256xf32>
    %cst_43 = arith.constant 0.000000e+00 : f32
    %87 = vector.broadcast %cst_43 : f32 to vector<64x256xf32>
    %88 = arith.maximumf %86, %87 : vector<64x256xf32>
    %89 = arith.truncf %88 : vector<64x256xf32> to vector<64x256xbf16>
    %c0_44 = arith.constant 0 : index
    %c0_45 = arith.constant 0 : index
    %90 = vector.load %arg8[%c0_44, %c0_45] : memref<256x256xbf16, #tpu.memory_space<vmem>>, vector<256x256xbf16>
    %cst_46 = arith.constant dense<0.000000e+00> : vector<64x256xf32>
    %91 = tpu.matmul %89, %90, %cst_46 {dimension_numbers = #tpu.dot_dimension_numbers<[1], [0], [0], [1], [0, 0, 1, 1], [], []>} : vector<64x256xbf16>, vector<256x256xbf16>, vector<64x256xf32> -> vector<64x256xf32>
    %c0_47 = arith.constant 0 : index
    %c2432 = arith.constant 2432 : index
    %92 = vector.load %arg1[%c0_47, %c2432] : memref<1x2816xf32, #tpu.memory_space<vmem>>, vector<1x256xf32>
    %93 = vector.broadcast %92 : vector<1x256xf32> to vector<64x256xf32>
    %94 = arith.addf %91, %93 : vector<64x256xf32>
    %cst_48 = arith.constant 0.000000e+00 : f32
    %95 = vector.broadcast %cst_48 : f32 to vector<64x256xf32>
    %96 = arith.maximumf %94, %95 : vector<64x256xf32>
    %97 = arith.truncf %96 : vector<64x256xf32> to vector<64x256xbf16>
    %c0_49 = arith.constant 0 : index
    %c0_50 = arith.constant 0 : index
    %98 = vector.load %arg9[%c0_49, %c0_50] : memref<256x128xbf16, #tpu.memory_space<vmem>>, vector<256x128xbf16>
    %cst_51 = arith.constant dense<0.000000e+00> : vector<64x128xf32>
    %99 = tpu.matmul %97, %98, %cst_51 {dimension_numbers = #tpu.dot_dimension_numbers<[1], [0], [0], [1], [0, 0, 1, 1], [], []>} : vector<64x256xbf16>, vector<256x128xbf16>, vector<64x128xf32> -> vector<64x128xf32>
    %c0_52 = arith.constant 0 : index
    %c2688 = arith.constant 2688 : index
    %100 = vector.load %arg1[%c0_52, %c2688] : memref<1x2816xf32, #tpu.memory_space<vmem>>, vector<1x128xf32>
    %101 = vector.broadcast %100 : vector<1x128xf32> to vector<64x128xf32>
    %102 = arith.addf %99, %101 : vector<64x128xf32>
    %c0_53 = arith.constant 0 : index
    %c0_54 = arith.constant 0 : index
    %103 = vector.load %arg10[%c0_53, %c0_54] : memref<64x128xf32, #tpu.memory_space<vmem>>, vector<64x128xf32>
    tpu.vector_store %arg10[%c0_53, %c0_54], %102 {strides = array<i32>} : memref<64x128xf32, #tpu.memory_space<vmem>>, vector<64x128xf32>,
    return
  }
}

</mosaic_0001>

<llo_original>
// kernel: tpu_custom_call.1
$region0: #{tpu_custom_call.1}
  #allocation0 [shape = 'u32[]', space=smem, size = 0x4, offset = 0x4, fixed_abs, tag = 'smem constant byte address 0x4 - core index']
  #allocation1 [shape = 'u32[144,128]{1,0:T(1,128)}', space=vmem, size = 0x12000, scoped, tag = 'internal scratch']
  %s0 = inlined_call_operand.hbm [shape: f32[64,128], index: 0, kind: input, shape index: {}]
  %s1 = inlined_call_operand.hbm [shape: f32[1,2816], index: 1, kind: input, shape index: {}]
  %s2 = inlined_call_operand.hbm [shape: bf16[128,128], index: 2, kind: input, shape index: {}]
  %s3 = inlined_call_operand.hbm [shape: bf16[128,256], index: 3, kind: input, shape index: {}]
  %s4 = inlined_call_operand.hbm [shape: bf16[256,256], index: 4, kind: input, shape index: {}]
  %s5 = inlined_call_operand.hbm [shape: bf16[256,256], index: 5, kind: input, shape index: {}]
  %s6 = inlined_call_operand.hbm [shape: bf16[256,256], index: 6, kind: input, shape index: {}]
  %s7 = inlined_call_operand.hbm [shape: bf16[256,256], index: 7, kind: input, shape index: {}]
  %s8 = inlined_call_operand.hbm [shape: bf16[256,256], index: 8, kind: input, shape index: {}]
  %s9 = inlined_call_operand.hbm [shape: bf16[256,128], index: 9, kind: input, shape index: {}]
  %s10 = inlined_call_operand.hbm [shape: f32[64,128], index: 10, kind: output, shape index: {}]
  %s11 = sld [smem:[#allocation0]]
  $region90: #{tpu_custom_call.1} parent=0
    _
  %s13 = ssub.s32 1, %s11
  %s14 = scalar_select 0, %s13, %s11
  $region1: #{tpu_custom_call.1} parent=0
    #allocation2 [shape = 'u8[32768]{0}', space=vmem, size = 0x8000, scoped, tag = 'input window, operand 0, single buffered']
    #allocation3 [shape = 's32[1]{0}', space=sflag, size = 0x4, scoped, tag = 'scoped memory for tpu_custom_call.1']
    #allocation4 [shape = 's32[1]{0}', space=sflag, size = 0x4, scoped, tag = 'scoped memory for tpu_custom_call.1']
    #allocation5 [shape = 'u8[11264]{0}', space=vmem, size = 0x2c00, scoped, tag = 'input window, operand 1, single buffered']
    #allocation6 [shape = 's32[1]{0}', space=sflag, size = 0x4, scoped, tag = 'scoped memory for tpu_custom_call.1']
    #allocation7 [shape = 'u8[32768]{0}', space=vmem, size = 0x8000, scoped, tag = 'input window, operand 2, single buffered']
    #allocation8 [shape = 'u8[65536]{0}', space=vmem, size = 0x10000, scoped, tag = 'input window, operand 3, single buffered']
    #allocation9 [shape = 's32[1]{0}', space=sflag, size = 0x4, scoped, tag = 'scoped memory for tpu_custom_call.1']
    #allocation10 [shape = 'u8[131072]{0}', space=vmem, size = 0x20000, scoped, tag = 'input window, operand 4, single buffered']
    #allocation11 [shape = 'u8[131072]{0}', space=vmem, size = 0x20000, scoped, tag = 'input window, operand 5, single buffered']
    #allocation12 [shape = 's32[1]{0}', space=sflag, size = 0x4, scoped, tag = 'scoped memory for tpu_custom_call.1']
    #allocation13 [shape = 'u8[131072]{0}', space=vmem, size = 0x20000, scoped, tag = 'input window, operand 6, single buffered']
    #allocation14 [shape = 'u8[131072]{0}', space=vmem, size = 0x20000, scoped, tag = 'input window, operand 7, single buffered']
    #allocation15 [shape = 's32[1]{0}', space=sflag, size = 0x4, scoped, tag = 'scoped memory for tpu_custom_call.1']
    #allocation16 [shape = 'u8[131072]{0}', space=vmem, size = 0x20000, scoped, tag = 'input window, operand 8, single buffered']
    #allocation17 [shape = 'u8[65536]{0}', space=vmem, size = 0x10000, scoped, tag = 'input window, operand 9, single buffered']
    #allocation18 [shape = 's32[1]{0}', space=sflag, size = 0x4, scoped, tag = 'scoped memory for tpu_custom_call.1']
    #allocation19 [shape = 'u8[32768]{0}', space=vmem, size = 0x8000, scoped, tag = 'output window, operand 0, single buffered']
    %15 = vsyncpa [#allocation3], 0
    %16 = vsyncpa [#allocation6], 0
    %17 = vsyncpa [#allocation9], 0
    %18 = vsyncpa [#allocation12], 0
    %19 = vsyncpa [#allocation15], 0
    %20 = vsyncpa [#allocation18], 0
    %21 = vsyncpa [#allocation4], 0
    // Predicated region
    $region2: #{tpu_custom_call.1} parent=1 // pred_check
      _
    $region3: #{tpu_custom_call.1} parent=1 // pred_check_branch
      %23 = sbr.rel (0) target = $region5
    $region4: #{tpu_custom_call.1} parent=1 // pred_region
      %s25 = ssub.s32 1024, 1024
      %26 = vsyncadd [#allocation3], %s25
      %s27 = sshll.u32 [#allocation2], 4
      %s28 = int_to_ptr.vmem [resolvable:$true] %s27
      %33 = dma.hbm_to_vmem [thread:$0]  %s0, 1024, %s28, [#allocation3], 128, 128, 8
    $region5: #{tpu_custom_call.1} parent=1 // pred_fallthru
      _
    // Predicated region
    $region6: #{tpu_custom_call.1} parent=1 // pred_check
      _
    $region7: #{tpu_custom_call.1} parent=1 // pred_check_branch
      %35 = sbr.rel (0) target = $region9
    $region8: #{tpu_custom_call.1} parent=1 // pred_region
      %s37 = ssub.s32 352, 352
      %38 = vsyncadd [#allocation6], %s37
      %s40 = sshll.u32 [#allocation5], 4
      %s41 = int_to_ptr.vmem [resolvable:$true] %s40
      %43 = dma.hbm_to_vmem [thread:$0]  %s1, 352, %s41, [#allocation6]
    $region9: #{tpu_custom_call.1} parent=1 // pred_fallthru
      _
    // Predicated region
    $region10: #{tpu_custom_call.1} parent=1 // pred_check
      _
    $region11: #{tpu_custom_call.1} parent=1 // pred_check_branch
      %45 = sbr.rel (0) target = $region13
    $region12: #{tpu_custom_call.1} parent=1 // pred_region
      %s47 = ssub.s32 1024, 1024
      %48 = vsyncadd [#allocation6], %s47
      %s49 = sshll.u32 [#allocation7], 4
      %s50 = int_to_ptr.vmem [resolvable:$true] %s49
      %55 = dma.hbm_to_vmem [thread:$0]  %s2, 1024, %s50, [#allocation6], 64, 64, 4
    $region13: #{tpu_custom_call.1} parent=1 // pred_fallthru
      _
    // Predicated region
    $region14: #{tpu_custom_call.1} parent=1 // pred_check
      _
    $region15: #{tpu_custom_call.1} parent=1 // pred_check_branch
      %57 = sbr.rel (0) target = $region17
    $region16: #{tpu_custom_call.1} parent=1 // pred_region
      %s59 = ssub.s32 2048, 2048
      %60 = vsyncadd [#allocation9], %s59
      %s61 = sshll.u32 [#allocation8], 4
      %s62 = int_to_ptr.vmem [resolvable:$true] %s61
      %67 = dma.hbm_to_vmem [thread:$0]  %s3, 2048, %s62, [#allocation9], 128, 128, 8
    $region17: #{tpu_custom_call.1} parent=1 // pred_fallthru
      _
    // Predicated region
    $region18: #{tpu_custom_call.1} parent=1 // pred_check
      _
    $region19: #{tpu_custom_call.1} parent=1 // pred_check_branch
      %69 = sbr.rel (0) target = $region21
    $region20: #{tpu_custom_call.1} parent=1 // pred_region
      %s71 = ssub.s32 4096, 4096
      %72 = vsyncadd [#allocation9], %s71
      %s73 = sshll.u32 [#allocation10], 4
      %s74 = int_to_ptr.vmem [resolvable:$true] %s73
      %79 = dma.hbm_to_vmem [thread:$0]  %s4, 4096, %s74, [#allocation9], 128, 128, 8
    $region21: #{tpu_custom_call.1} parent=1 // pred_fallthru
      _
    // Predicated region
    $region22: #{tpu_custom_call.1} parent=1 // pred_check
      _
    $region23: #{tpu_custom_call.1} parent=1 // pred_check_branch
      %81 = sbr.rel (0) target = $region25
    $region24: #{tpu_custom_call.1} parent=1 // pred_region
      %s83 = ssub.s32 4096, 4096
      %84 = vsyncadd [#allocation12], %s83
      %s85 = sshll.u32 [#allocation11], 4
      %s86 = int_to_ptr.vmem [resolvable:$true] %s85
      %91 = dma.hbm_to_vmem [thread:$0]  %s5, 4096, %s86, [#allocation12], 128, 128, 8
    $region25: #{tpu_custom_call.1} parent=1 // pred_fallthru
      _
    // Predicated region
    $region26: #{tpu_custom_call.1} parent=1 // pred_check
      _
    $region27: #{tpu_custom_call.1} parent=1 // pred_check_branch
      %93 = sbr.rel (0) target = $region29
    $region28: #{tpu_custom_call.1} parent=1 // pred_region
      %s95 = ssub.s32 4096, 4096
      %96 = vsyncadd [#allocation12], %s95
      %s97 = sshll.u32 [#allocation13], 4
      %s98 = int_to_ptr.vmem [resolvable:$true] %s97
      %103 = dma.hbm_to_vmem [thread:$0]  %s6, 4096, %s98, [#allocation12], 128, 128, 8
    $region29: #{tpu_custom_call.1} parent=1 // pred_fallthru
      _
    // Predicated region
    $region30: #{tpu_custom_call.1} parent=1 // pred_check
      _
    $region31: #{tpu_custom_call.1} parent=1 // pred_check_branch
      %105 = sbr.rel (0) target = $region33
    $region32: #{tpu_custom_call.1} parent=1 // pred_region
      %s107 = ssub.s32 4096, 4096
      %108 = vsyncadd [#allocation15], %s107
      %s109 = sshll.u32 [#allocation14], 4
      %s110 = int_to_ptr.vmem [resolvable:$true] %s109
      %115 = dma.hbm_to_vmem [thread:$0]  %s7, 4096, %s110, [#allocation15], 128, 128, 8
    $region33: #{tpu_custom_call.1} parent=1 // pred_fallthru
      _
    // Predicated region
    $region34: #{tpu_custom_call.1} parent=1 // pred_check
      _
    $region35: #{tpu_custom_call.1} parent=1 // pred_check_branch
      %117 = sbr.rel (0) target = $region37
    $region36: #{tpu_custom_call.1} parent=1 // pred_region
      %s119 = ssub.s32 4096, 4096
      %120 = vsyncadd [#allocation15], %s119
      %s121 = sshll.u32 [#allocation16], 4
      %s122 = int_to_ptr.vmem [resolvable:$true] %s121
      %127 = dma.hbm_to_vmem [thread:$0]  %s8, 4096, %s122, [#allocation15], 128, 128, 8
    $region37: #{tpu_custom_call.1} parent=1 // pred_fallthru
      _
    // Predicated region
    $region38: #{tpu_custom_call.1} parent=1 // pred_check
      _
    $region39: #{tpu_custom_call.1} parent=1 // pred_check_branch
      %129 = sbr.rel (0) target = $region41
    $region40: #{tpu_custom_call.1} parent=1 // pred_region
      %s131 = ssub.s32 2048, 2048
      %132 = vsyncadd [#allocation18], %s131
      %s133 = sshll.u32 [#allocation17], 4
      %s134 = int_to_ptr.vmem [resolvable:$true] %s133
      %139 = dma.hbm_to_vmem [thread:$0]  %s9, 2048, %s134, [#allocation18], 64, 64, 4
    $region41: #{tpu_custom_call.1} parent=1 // pred_fallthru
      _
    // Predicated region
    $region42: #{tpu_custom_call.1} parent=1 // pred_check
      _
    $region43: #{tpu_custom_call.1} parent=1 // pred_check_branch
      %141 = sbr.rel (0) target = $region45
    $region44: #{tpu_custom_call.1} parent=1 // pred_region
      %142 = dma.done [#allocation3], 1024
    $region45: #{tpu_custom_call.1} parent=1 // pred_fallthru
      _
    // Predicated region
    $region46: #{tpu_custom_call.1} parent=1 // pred_check
      _
    $region47: #{tpu_custom_call.1} parent=1 // pred_check_branch
      %144 = sbr.rel (0) target = $region49
    $region48: #{tpu_custom_call.1} parent=1 // pred_region
      %145 = dma.done [#allocation6], 352
    $region49: #{tpu_custom_call.1} parent=1 // pred_fallthru
      _
    // Predicated region
    $region50: #{tpu_custom_call.1} parent=1 // pred_check
      _
    $region51: #{tpu_custom_call.1} parent=1 // pred_check_branch
      %147 = sbr.rel (0) target = $region53
    $region52: #{tpu_custom_call.1} parent=1 // pred_region
      %148 = dma.done [#allocation6], 1024
    $region53: #{tpu_custom_call.1} parent=1 // pred_fallthru
      _
    // Predicated region
    $region54: #{tpu_custom_call.1} parent=1 // pred_check
      _
    $region55: #{tpu_custom_call.1} parent=1 // pred_check_branch
      %150 = sbr.rel (0) target = $region57
    $region56: #{tpu_custom_call.1} parent=1 // pred_region
      %151 = dma.done [#allocation9], 2048
    $region57: #{tpu_custom_call.1} parent=1 // pred_fallthru
      _
    // Predicated region
    $region58: #{tpu_custom_call.1} parent=1 // pred_check
      _
    $region59: #{tpu_custom_call.1} parent=1 // pred_check_branch
      %153 = sbr.rel (0) target = $region61
    $region60: #{tpu_custom_call.1} parent=1 // pred_region
      %154 = dma.done [#allocation9], 4096
    $region61: #{tpu_custom_call.1} parent=1 // pred_fallthru
      _
    // Predicated region
    $region62: #{tpu_custom_call.1} parent=1 // pred_check
      _
    $region63: #{tpu_custom_call.1} parent=1 // pred_check_branch
      %156 = sbr.rel (0) target = $region65
    $region64: #{tpu_custom_call.1} parent=1 // pred_region
      %157 = dma.done [#allocation12], 4096
    $region65: #{tpu_custom_call.1} parent=1 // pred_fallthru
      _
    // Predicated region
    $region66: #{tpu_custom_call.1} parent=1 // pred_check
      _
    $region67: #{tpu_custom_call.1} parent=1 // pred_check_branch
      %159 = sbr.rel (0) target = $region69
    $region68: #{tpu_custom_call.1} parent=1 // pred_region
      %160 = dma.done [#allocation12], 4096
    $region69: #{tpu_custom_call.1} parent=1 // pred_fallthru
      _
    // Predicated region
    $region70: #{tpu_custom_call.1} parent=1 // pred_check
      _
    $region71: #{tpu_custom_call.1} parent=1 // pred_check_branch
      %162 = sbr.rel (0) target = $region73
    $region72: #{tpu_custom_call.1} parent=1 // pred_region
      %163 = dma.done [#allocation15], 4096
    $region73: #{tpu_custom_call.1} parent=1 // pred_fallthru
      _
    // Predicated region
    $region74: #{tpu_custom_call.1} parent=1 // pred_check
      _
    $region75: #{tpu_custom_call.1} parent=1 // pred_check_branch
      %165 = sbr.rel (0) target = $region77
    $region76: #{tpu_custom_call.1} parent=1 // pred_region
      %166 = dma.done [#allocation15], 4096
    $region77: #{tpu_custom_call.1} parent=1 // pred_fallthru
      _
    // Predicated region
    $region78: #{tpu_custom_call.1} parent=1 // pred_check
      _
    $region79: #{tpu_custom_call.1} parent=1 // pred_check_branch
      %168 = sbr.rel (0) target = $region81
    $region80: #{tpu_custom_call.1} parent=1 // pred_region
      %169 = dma.done [#allocation18], 2048
    $region81: #{tpu_custom_call.1} parent=1 // pred_fallthru
      _
    %v171 = vld [vmem:[#allocation2] sm:$0xff]
    %v172 = vld [vmem:[#allocation2 + $0x8] sm:$0xff]
    %v173 = vld [vmem:[#allocation2 + $0x10] sm:$0xff]
    %v174 = vld [vmem:[#allocation2 + $0x18] sm:$0xff]
    %v175 = vld [vmem:[#allocation2 + $0x20] sm:$0xff]
    %v176 = vld [vmem:[#allocation2 + $0x28] sm:$0xff]
    %v177 = vld [vmem:[#allocation2 + $0x30] sm:$0xff]
    %v178 = vld [vmem:[#allocation2 + $0x38] sm:$0xff]
    %v179 = vpack.c.bf16 %v172, %v171
    %v180 = vpack.c.bf16 %v174, %v173
    %v181 = vpack.c.bf16 %v176, %v175
    %v182 = vpack.c.bf16 %v178, %v177
    %v183 = vld [vmem:[#allocation7] sm:$0xf]
    %v184 = vld [vmem:[#allocation7 + $0x4] sm:$0xf]
    %v185 = vld [vmem:[#allocation7 + $0x8] sm:$0xf]
    %v186 = vld [vmem:[#allocation7 + $0xc] sm:$0xf]
    %v187 = vld [vmem:[#allocation7 + $0x10] sm:$0xf]
    %v188 = vld [vmem:[#allocation7 + $0x14] sm:$0xf]
    %v189 = vld [vmem:[#allocation7 + $0x18] sm:$0xf]
    %v190 = vld [vmem:[#allocation7 + $0x1c] sm:$0xf]
    %v191 = vld [vmem:[#allocation7 + $0x20] sm:$0xf]
    %v192 = vld [vmem:[#allocation7 + $0x24] sm:$0xf]
    %v193 = vld [vmem:[#allocation7 + $0x28] sm:$0xf]
    %v194 = vld [vmem:[#allocation7 + $0x2c] sm:$0xf]
    %v195 = vld [vmem:[#allocation7 + $0x30] sm:$0xf]
    %v196 = vld [vmem:[#allocation7 + $0x34] sm:$0xf]
    %v197 = vld [vmem:[#allocation7 + $0x38] sm:$0xf]
    %v198 = vld [vmem:[#allocation7 + $0x3c] sm:$0xf]
    %v199 = vld [vmem:[#allocation5] sm:$0x1]
    %v201 = vlaneseq
    %v202 = vshrl.u32 %v201, 7
    %v203 = vsub.s32 0, %v202
    %v204 = vrot.slane %v199, %v203
    %v222 = vunpack.c.l.b16 %v183
    %v223 = vunpack.c.l.b16 %v184
    %v224 = vunpack.c.l.b16 %v185
    %v225 = vunpack.c.l.b16 %v186
    %v226 = vunpack.c.l.b16 %v187
    %v227 = vunpack.c.l.b16 %v188
    %v228 = vunpack.c.l.b16 %v189
    %v229 = vunpack.c.l.b16 %v190
    %v230 = vunpack.c.l.b16 %v191
    %v231 = vunpack.c.l.b16 %v192
    %v232 = vunpack.c.l.b16 %v193
    %v233 = vunpack.c.l.b16 %v194
    %v234 = vunpack.c.l.b16 %v195
    %v235 = vunpack.c.l.b16 %v196
    %v236 = vunpack.c.l.b16 %v197
    %v237 = vunpack.c.l.b16 %v198
    %v238 = vpack.c.b16 %v223, %v222
    %v239 = vpack.c.b16 %v225, %v224
    %v240 = vpack.c.b16 %v227, %v226
    %v241 = vpack.c.b16 %v229, %v228
    %v242 = vpack.c.b16 %v231, %v230
    %v243 = vpack.c.b16 %v233, %v232
    %v244 = vpack.c.b16 %v235, %v234
    %v245 = vpack.c.b16 %v237, %v236
    %254 = vmatprep.subr.bf16.mxu0 0
    %255 = vmatpush1.bf16.msra.mxu0 %v238
    %256 = vmatprep.subr.bf16.mxu0 0
    %257 = vmatpush1.bf16.msra.mxu0 %v239
    %258 = vmatprep.subr.bf16.mxu0 0
    %259 = vmatpush1.bf16.msra.mxu0 %v240
    %260 = vmatprep.subr.bf16.mxu0 0
    %261 = vmatpush1.bf16.msra.mxu0 %v241
    %262 = vmatprep.subr.bf16.mxu0 0
    %263 = vmatpush1.bf16.msra.mxu0 %v242
    %264 = vmatprep.subr.bf16.mxu0 0
    %265 = vmatpush1.bf16.msra.mxu0 %v243
    %266 = vmatprep.subr.bf16.mxu0 0
    %267 = vmatpush1.bf16.msra.mxu0 %v244
    %268 = vmatprep.subr.bf16.mxu0 0
    %269 = vmatpush1.bf16.msra.mxu0 %v245
    %270 = vmatprep.subr.bf16.mxu0 0
    %271 = vmatpush1.bf16.msra.mxu0 0
    %272 = vmatprep.subr.bf16.mxu0 0
    %273 = vmatpush1.bf16.msra.mxu0 0
    %274 = vmatprep.subr.bf16.mxu0 0
    %275 = vmatpush1.bf16.msra.mxu0 0
    %276 = vmatprep.subr.bf16.mxu0 0
    %277 = vmatpush1.bf16.msra.mxu0 0
    %278 = vmatprep.subr.bf16.mxu0 0
    %279 = vmatpush1.bf16.msra.mxu0 0
    %280 = vmatprep.subr.bf16.mxu0 0
    %281 = vmatpush1.bf16.msra.mxu0 0
    %282 = vmatprep.subr.bf16.mxu0 0
    %283 = vmatpush1.bf16.msra.mxu0 0
    %284 = vmatprep.subr.bf16.mxu0 0
    %285 = vmatpush1.bf16.msra.mxu0 0
    %286 = vmatprep.mubr.bf16.mxu0 0
    %287 = vmatmul.mubr.bf16.gmra.mrb[0].mxu0 %v179
    %v288 = vpop.f32.mrb[0].mxu0
    %v289 = vadd.f32 %v204, %v288
    %v290 = vpop.f32.mrb[0].mxu0
    %v291 = vpop.f32.mrb[0].mxu0
    %v292 = vadd.f32 %v204, %v291
    %v293 = vpop.f32.mrb[0].mxu0
    %294 = vmatprep.mubr.bf16.mxu0 0
    %295 = vmatmul.mubr.bf16.gmra.mrb[0].mxu0 %v180
    %v296 = vpop.f32.mrb[0].mxu0
    %v297 = vadd.f32 %v204, %v296
    %v298 = vpop.f32.mrb[0].mxu0
    %v299 = vpop.f32.mrb[0].mxu0
    %v300 = vadd.f32 %v204, %v299
    %v301 = vpop.f32.mrb[0].mxu0
    %302 = vmatprep.mubr.bf16.mxu0 0
    %303 = vmatmul.mubr.bf16.gmra.mrb[0].mxu0 %v181
    %v304 = vpop.f32.mrb[0].mxu0
    %v305 = vadd.f32 %v204, %v304
    %v306 = vpop.f32.mrb[0].mxu0
    %v307 = vpop.f32.mrb[0].mxu0
    %v308 = vadd.f32 %v204, %v307
    %v309 = vpop.f32.mrb[0].mxu0
    %310 = vmatprep.mubr.bf16.mxu0 0
    %311 = vmatmul.mubr.bf16.gmra.mrb[0].mxu0 %v182
    %v312 = vpop.f32.mrb[0].mxu0
    %v313 = vadd.f32 %v204, %v312
    %v314 = vpop.f32.mrb[0].mxu0
    %v315 = vpop.f32.mrb[0].mxu0
    %v316 = vadd.f32 %v204, %v315
    %v317 = vpop.f32.mrb[0].mxu0
    %318 = vdwg.mxu0
    %v319 = vmax.f32 %v289, 0.0
    %v320 = vmax.f32 %v292, 0.0
    %v321 = vmax.f32 %v297, 0.0
    %v322 = vmax.f32 %v300, 0.0
    %v323 = vmax.f32 %v305, 0.0
    %v324 = vmax.f32 %v308, 0.0
    %v325 = vmax.f32 %v313, 0.0
    %v326 = vmax.f32 %v316, 0.0
    %v327 = vpack.c.bf16 %v320, %v319
    %v328 = vpack.c.bf16 %v322, %v321
    %v329 = vpack.c.bf16 %v324, %v323
    %v330 = vpack.c.bf16 %v326, %v325
    %v331 = vld [vmem:[#allocation8] sm:$0xff]
    %v332 = vld [vmem:[#allocation8 + $0x8] sm:$0xff]
    %v333 = vld [vmem:[#allocation8 + $0x10] sm:$0xff]
    %v334 = vld [vmem:[#allocation8 + $0x18] sm:$0xff]
    %v335 = vld [vmem:[#allocation8 + $0x20] sm:$0xff]
    %v336 = vld [vmem:[#allocation8 + $0x28] sm:$0xff]
    %v337 = vld [vmem:[#allocation8 + $0x30] sm:$0xff]
    %v338 = vld [vmem:[#allocation8 + $0x38] sm:$0xff]
    %v339 = vld [vmem:[#allocation8 + $0x40] sm:$0xff]
    %v340 = vld [vmem:[#allocation8 + $0x48] sm:$0xff]
    %v341 = vld [vmem:[#allocation8 + $0x50] sm:$0xff]
    %v342 = vld [vmem:[#allocation8 + $0x58] sm:$0xff]
    %v343 = vld [vmem:[#allocation8 + $0x60] sm:$0xff]
    %v344 = vld [vmem:[#allocation8 + $0x68] sm:$0xff]
    %v345 = vld [vmem:[#allocation8 + $0x70] sm:$0xff]
    %v346 = vld [vmem:[#allocation8 + $0x78] sm:$0xff]
    %v347 = vld [vmem:[#allocation5 + $0x1] sm:$0x3]
    %v349 = vlaneseq
    %v350 = vshrl.u32 %v349, 7
    %v351 = vsub.s32 0, %v350
    %v352 = vrot.slane %v347, %v351
    %v353 = vlaneseq
    %v354 = vshrl.u32 %v353, 7
    %v355 = vsub.s32 1, %v354
    %v356 = vrot.slane %v347, %v355
    %v375 = vunpack.c.l.b16 %v331
    %v376 = vunpack.c.h.b16 %v331
    %v377 = vunpack.c.l.b16 %v332
    %v378 = vunpack.c.h.b16 %v332
    %v379 = vunpack.c.l.b16 %v333
    %v380 = vunpack.c.h.b16 %v333
    %v381 = vunpack.c.l.b16 %v334
    %v382 = vunpack.c.h.b16 %v334
    %v383 = vunpack.c.l.b16 %v335
    %v384 = vunpack.c.h.b16 %v335
    %v385 = vunpack.c.l.b16 %v336
    %v386 = vunpack.c.h.b16 %v336
    %v387 = vunpack.c.l.b16 %v337
    %v388 = vunpack.c.h.b16 %v337
    %v389 = vunpack.c.l.b16 %v338
    %v390 = vunpack.c.h.b16 %v338
    %v391 = vunpack.c.l.b16 %v339
    %v392 = vunpack.c.h.b16 %v339
    %v393 = vunpack.c.l.b16 %v340
    %v394 = vunpack.c.h.b16 %v340
    %v395 = vunpack.c.l.b16 %v341
    %v396 = vunpack.c.h.b16 %v341
    %v397 = vunpack.c.l.b16 %v342
    %v398 = vunpack.c.h.b16 %v342
    %v399 = vunpack.c.l.b16 %v343
    %v400 = vunpack.c.h.b16 %v343
    %v401 = vunpack.c.l.b16 %v344
    %v402 = vunpack.c.h.b16 %v344
    %v403 = vunpack.c.l.b16 %v345
    %v404 = vunpack.c.h.b16 %v345
    %v405 = vunpack.c.l.b16 %v346
    %v406 = vunpack.c.h.b16 %v346
    %v407 = vpack.c.b16 %v377, %v375
    %v408 = vpack.c.b16 %v378, %v376
    %v409 = vpack.c.b16 %v381, %v379
    %v410 = vpack.c.b16 %v382, %v380
    %v411 = vpack.c.b16 %v385, %v383
    %v412 = vpack.c.b16 %v386, %v384
    %v413 = vpack.c.b16 %v389, %v387
    %v414 = vpack.c.b16 %v390, %v388
    %v415 = vpack.c.b16 %v393, %v391
    %v416 = vpack.c.b16 %v394, %v392
    %v417 = vpack.c.b16 %v397, %v395
    %v418 = vpack.c.b16 %v398, %v396
    %v419 = vpack.c.b16 %v401, %v399
    %v420 = vpack.c.b16 %v402, %v400
    %v421 = vpack.c.b16 %v405, %v403
    %v422 = vpack.c.b16 %v406, %v404
    %439 = vmatprep.subr.bf16.mxu0 %v408
    %440 = vmatpush1.bf16.msra.mxu0 %v407
    %441 = vmatprep.subr.bf16.mxu0 %v410
    %442 = vmatpush1.bf16.msra.mxu0 %v409
    %443 = vmatprep.subr.bf16.mxu0 %v412
    %444 = vmatpush1.bf16.msra.mxu0 %v411
    %445 = vmatprep.subr.bf16.mxu0 %v414
    %446 = vmatpush1.bf16.msra.mxu0 %v413
    %447 = vmatprep.subr.bf16.mxu0 %v416
    %448 = vmatpush1.bf16.msra.mxu0 %v415
    %449 = vmatprep.subr.bf16.mxu0 %v418
    %450 = vmatpush1.bf16.msra.mxu0 %v417
    %451 = vmatprep.subr.bf16.mxu0 %v420
    %452 = vmatpush1.bf16.msra.mxu0 %v419
    %453 = vmatprep.subr.bf16.mxu0 %v422
    %454 = vmatpush1.bf16.msra.mxu0 %v421
    %455 = vmatprep.subr.bf16.mxu0 0
    %456 = vmatpush1.bf16.msra.mxu0 0
    %457 = vmatprep.subr.bf16.mxu0 0
    %458 = vmatpush1.bf16.msra.mxu0 0
    %459 = vmatprep.subr.bf16.mxu0 0
    %460 = vmatpush1.bf16.msra.mxu0 0
    %461 = vmatprep.subr.bf16.mxu0 0
    %462 = vmatpush1.bf16.msra.mxu0 0
    %463 = vmatprep.subr.bf16.mxu0 0
    %464 = vmatpush1.bf16.msra.mxu0 0
    %465 = vmatprep.subr.bf16.mxu0 0
    %466 = vmatpush1.bf16.msra.mxu0 0
    %467 = vmatprep.subr.bf16.mxu0 0
    %468 = vmatpush1.bf16.msra.mxu0 0
    %469 = vmatprep.subr.bf16.mxu0 0
    %470 = vmatpush1.bf16.msra.mxu0 0
    %471 = vmatprep.mubr.bf16.mxu0 0
    %472 = vmatmul.mubr.bf16.gmra.mrb[0].mxu0 %v327
    %v473 = vpop.f32.mrb[0].mxu0
    %v474 = vadd.f32 %v352, %v473
    %v475 = vpop.f32.mrb[0].mxu0
    %v476 = vadd.f32 %v356, %v475
    %v477 = vpop.f32.mrb[0].mxu0
    %v478 = vadd.f32 %v352, %v477
    %v479 = vpop.f32.mrb[0].mxu0
    %v480 = vadd.f32 %v356, %v479
    %481 = vmatprep.mubr.bf16.mxu0 0
    %482 = vmatmul.mubr.bf16.gmra.mrb[0].mxu0 %v328
    %v483 = vpop.f32.mrb[0].mxu0
    %v484 = vadd.f32 %v352, %v483
    %v485 = vpop.f32.mrb[0].mxu0
    %v486 = vadd.f32 %v356, %v485
    %v487 = vpop.f32.mrb[0].mxu0
    %v488 = vadd.f32 %v352, %v487
    %v489 = vpop.f32.mrb[0].mxu0
    %v490 = vadd.f32 %v356, %v489
    %491 = vmatprep.mubr.bf16.mxu0 0
    %492 = vmatmul.mubr.bf16.gmra.mrb[0].mxu0 %v329
    %v493 = vpop.f32.mrb[0].mxu0
    %v494 = vadd.f32 %v352, %v493
    %v495 = vpop.f32.mrb[0].mxu0
    %v496 = vadd.f32 %v356, %v495
    %v497 = vpop.f32.mrb[0].mxu0
    %v498 = vadd.f32 %v352, %v497
    %v499 = vpop.f32.mrb[0].mxu0
    %v500 = vadd.f32 %v356, %v499
    %501 = vmatprep.mubr.bf16.mxu0 0
    %502 = vmatmul.mubr.bf16.gmra.mrb[0].mxu0 %v330
    %v503 = vpop.f32.mrb[0].mxu0
    %v504 = vadd.f32 %v352, %v503
    %v505 = vpop.f32.mrb[0].mxu0
    %v506 = vadd.f32 %v356, %v505
    %v507 = vpop.f32.mrb[0].mxu0
    %v508 = vadd.f32 %v352, %v507
    %v509 = vpop.f32.mrb[0].mxu0
    %v510 = vadd.f32 %v356, %v509
    %511 = vdwg.mxu0
    %v512 = vadd.f32 %v474, %v478
    %v513 = vadd.f32 %v512, %v484
    %v514 = vadd.f32 %v513, %v488
    %v515 = vadd.f32 %v514, %v494
    %v516 = vadd.f32 %v515, %v498
    %v517 = vadd.f32 %v516, %v504
    %v518 = vadd.f32 %v517, %v508
    %v519 = vrot.slane %v518, 4
    %v520 = vadd.f32 %v518, %v519
    %v521 = vrot.slane %v520, 2
    %v522 = vadd.f32 %v520, %v521
    %v523 = vrot.slane %v522, 1
    %v524 = vadd.f32 %v522, %v523
    %v525 = vadd.f32 %v476, %v480
    %v526 = vadd.f32 %v525, %v486
    %v527 = vadd.f32 %v526, %v490
    %v528 = vadd.f32 %v527, %v496
    %v529 = vadd.f32 %v528, %v500
    %v530 = vadd.f32 %v529, %v506
    %v531 = vadd.f32 %v530, %v510
    %v532 = vrot.slane %v531, 4
    %v533 = vadd.f32 %v531, %v532
    %v534 = vrot.slane %v533, 2
    %v535 = vadd.f32 %v533, %v534
    %v536 = vrot.slane %v535, 1
    %v537 = vadd.f32 %v535, %v536
    %v538 = vrcp.pop 64.0
    %v539 = vmul.f32 %v524, %v538
    %v540 = vmul.f32 %v537, %v538
    %v541 = vsub.f32 %v474, %v539
    %v542 = vsub.f32 %v476, %v540
    %v543 = vsub.f32 %v478, %v539
    %v544 = vsub.f32 %v480, %v540
    %v545 = vsub.f32 %v484, %v539
    %v546 = vsub.f32 %v486, %v540
    %v547 = vsub.f32 %v488, %v539
    %v548 = vsub.f32 %v490, %v540
    %v549 = vsub.f32 %v494, %v539
    %v550 = vsub.f32 %v496, %v540
    %v551 = vsub.f32 %v498, %v539
    %v552 = vsub.f32 %v500, %v540
    %v553 = vsub.f32 %v504, %v539
    %v554 = vsub.f32 %v506, %v540
    %v555 = vsub.f32 %v508, %v539
    %v556 = vsub.f32 %v510, %v540
    %v557 = vmul.f32 %v541, %v541
    %v558 = vmul.f32 %v542, %v542
    %v559 = vmul.f32 %v543, %v543
    %v560 = vmul.f32 %v544, %v544
    %v561 = vmul.f32 %v545, %v545
    %v562 = vmul.f32 %v546, %v546
    %v563 = vmul.f32 %v547, %v547
    %v564 = vmul.f32 %v548, %v548
    %v565 = vmul.f32 %v549, %v549
    %v566 = vmul.f32 %v550, %v550
    %v567 = vmul.f32 %v551, %v551
    %v568 = vmul.f32 %v552, %v552
    %v569 = vmul.f32 %v553, %v553
    %v570 = vmul.f32 %v554, %v554
    %v571 = vmul.f32 %v555, %v555
    %v572 = vmul.f32 %v556, %v556
    %v573 = vadd.f32 %v557, %v559
    %v574 = vadd.f32 %v573, %v561
    %v575 = vadd.f32 %v574, %v563
    %v576 = vadd.f32 %v575, %v565
    %v577 = vadd.f32 %v576, %v567
    %v578 = vadd.f32 %v577, %v569
    %v579 = vadd.f32 %v578, %v571
    %v580 = vrot.slane %v579, 4
    %v581 = vadd.f32 %v579, %v580
    %v582 = vrot.slane %v581, 2
    %v583 = vadd.f32 %v581, %v582
    %v584 = vrot.slane %v583, 1
    %v585 = vadd.f32 %v583, %v584
    %v586 = vadd.f32 %v558, %v560
    %v587 = vadd.f32 %v586, %v562
    %v588 = vadd.f32 %v587, %v564
    %v589 = vadd.f32 %v588, %v566
    %v590 = vadd.f32 %v589, %v568
    %v591 = vadd.f32 %v590, %v570
    %v592 = vadd.f32 %v591, %v572
    %v593 = vrot.slane %v592, 4
    %v594 = vadd.f32 %v592, %v593
    %v595 = vrot.slane %v594, 2
    %v596 = vadd.f32 %v594, %v595
    %v597 = vrot.slane %v596, 1
    %v598 = vadd.f32 %v596, %v597
    %v599 = vmul.f32 %v585, %v538
    %v600 = vmul.f32 %v598, %v538
    %v601 = vld [vmem:[#allocation5 + $0x3] sm:$0x3]
    %v602 = vadd.f32 %v599, 1e-05
    %v603 = vadd.f32 %v600, 1e-05
    %v604 = vrsqrt.pop %v602
    %v605 = vrsqrt.pop %v603
    %v608 = vcombine.low %v604, %v605
    %v610 = vunpack.c.l.s4 1966171168
    %v611 = vunpack.c.0.s8 %v610
    %v612 = vlaneseq
    %v613 = vshrl.u32 %v612, 7
    %v614 = vsub.s32 %v611, %v613
    %v615 = vrot.slane %v608, %v614
    %v617 = vunpack.c.l.s4 1966171168
    %v618 = vunpack.c.0.s8 %v617
    %v619 = vlaneseq
    %v620 = vshrl.u32 %v619, 7
    %v621 = vsub.s32 %v618, %v620
    %v622 = vrot.slane %v615, %v621
    %v624 = vmul.f32 %v601, %v622
    %v626 = vlaneseq
    %v627 = vshrl.u32 %v626, 7
    %v628 = vsub.s32 0, %v627
    %v629 = vrot.slane %v624, %v628
    %v630 = vlaneseq
    %v631 = vshrl.u32 %v630, 7
    %v632 = vsub.s32 1, %v631
    %v633 = vrot.slane %v624, %v632
    %v636 = vmul.f32 %v541, %v629
    %v637 = vmul.f32 %v542, %v633
    %v638 = vmul.f32 %v543, %v629
    %v639 = vmul.f32 %v544, %v633
    %v640 = vmul.f32 %v545, %v629
    %v641 = vmul.f32 %v546, %v633
    %v642 = vmul.f32 %v547, %v629
    %v643 = vmul.f32 %v548, %v633
    %v644 = vmul.f32 %v549, %v629
    %v645 = vmul.f32 %v550, %v633
    %v646 = vmul.f32 %v551, %v629
    %v647 = vmul.f32 %v552, %v633
    %v648 = vmul.f32 %v553, %v629
    %v649 = vmul.f32 %v554, %v633
    %v650 = vmul.f32 %v555, %v629
    %v651 = vmul.f32 %v556, %v633
    %v652 = vld [vmem:[#allocation5 + $0x5] sm:$0x3]
    %v654 = vlaneseq
    %v655 = vshrl.u32 %v654, 7
    %v656 = vsub.s32 0, %v655
    %v657 = vrot.slane %v652, %v656
    %v658 = vlaneseq
    %v659 = vshrl.u32 %v658, 7
    %v660 = vsub.s32 1, %v659
    %v661 = vrot.slane %v652, %v660
    %v664 = vadd.f32 %v636, %v657
    %v665 = vadd.f32 %v637, %v661
    %v666 = vadd.f32 %v638, %v657
    %v667 = vadd.f32 %v639, %v661
    %v668 = vadd.f32 %v640, %v657
    %v669 = vadd.f32 %v641, %v661
    %v670 = vadd.f32 %v642, %v657
    %v671 = vadd.f32 %v643, %v661
    %v672 = vadd.f32 %v644, %v657
    %v673 = vadd.f32 %v645, %v661
    %v674 = vadd.f32 %v646, %v657
    %v675 = vadd.f32 %v647, %v661
    %v676 = vadd.f32 %v648, %v657
    %v677 = vadd.f32 %v649, %v661
    %v678 = vadd.f32 %v650, %v657
    %v679 = vadd.f32 %v651, %v661
    %v680 = vpack.c.bf16 %v666, %v664
    %v681 = vpack.c.bf16 %v667, %v665
    %v682 = vpack.c.bf16 %v670, %v668
    %v683 = vpack.c.bf16 %v671, %v669
    %v684 = vpack.c.bf16 %v674, %v672
    %v685 = vpack.c.bf16 %v675, %v673
    %v686 = vpack.c.bf16 %v678, %v676
    %v687 = vpack.c.bf16 %v679, %v677
    %v688 = vld [vmem:[#allocation10] sm:$0xff]
    %v689 = vld [vmem:[#allocation10 + $0x8] sm:$0xff]
    %v690 = vld [vmem:[#allocation10 + $0x10] sm:$0xff]
    %v691 = vld [vmem:[#allocation10 + $0x18] sm:$0xff]
    %v692 = vld [vmem:[#allocation10 + $0x20] sm:$0xff]
    %v693 = vld [vmem:[#allocation10 + $0x28] sm:$0xff]
    %v694 = vld [vmem:[#allocation10 + $0x30] sm:$0xff]
    %v695 = vld [vmem:[#allocation10 + $0x38] sm:$0xff]
    %v696 = vld [vmem:[#allocation10 + $0x40] sm:$0xff]
    %v697 = vld [vmem:[#allocation10 + $0x48] sm:$0xff]
    %v698 = vld [vmem:[#allocation10 + $0x50] sm:$0xff]
    %v699 = vld [vmem:[#allocation10 + $0x58] sm:$0xff]
    %v700 = vld [vmem:[#allocation10 + $0x60] sm:$0xff]
    %v701 = vld [vmem:[#allocation10 + $0x68] sm:$0xff]
    %v702 = vld [vmem:[#allocation10 + $0x70] sm:$0xff]
    %v703 = vld [vmem:[#allocation10 + $0x78] sm:$0xff]
    %v704 = vld [vmem:[#allocation10 + $0x80] sm:$0xff]
    %v705 = vld [vmem:[#allocation10 + $0x88] sm:$0xff]
    %v706 = vld [vmem:[#allocation10 + $0x90] sm:$0xff]
    %v707 = vld [vmem:[#allocation10 + $0x98] sm:$0xff]
    %v708 = vld [vmem:[#allocation10 + $0xa0] sm:$0xff]
    %v709 = vld [vmem:[#allocation10 + $0xa8] sm:$0xff]
    %v710 = vld [vmem:[#allocation10 + $0xb0] sm:$0xff]
    %v711 = vld [vmem:[#allocation10 + $0xb8] sm:$0xff]
    %v712 = vld [vmem:[#allocation10 + $0xc0] sm:$0xff]
    %v713 = vld [vmem:[#allocation10 + $0xc8] sm:$0xff]
    %v714 = vld [vmem:[#allocation10 + $0xd0] sm:$0xff]
    %v715 = vld [vmem:[#allocation10 + $0xd8] sm:$0xff]
    %v716 = vld [vmem:[#allocation10 + $0xe0] sm:$0xff]
    %v717 = vld [vmem:[#allocation10 + $0xe8] sm:$0xff]
    %v718 = vld [vmem:[#allocation10 + $0xf0] sm:$0xff]
    %v719 = vld [vmem:[#allocation10 + $0xf8] sm:$0xff]
    %v720 = vld [vmem:[#allocation5 + $0x7] sm:$0x3]
    %v722 = vlaneseq
    %v723 = vshrl.u32 %v722, 7
    %v724 = vsub.s32 0, %v723
    %v725 = vrot.slane %v720, %v724
    %v726 = vlaneseq
    %v727 = vshrl.u32 %v726, 7
    %v728 = vsub.s32 1, %v727
    %v729 = vrot.slane %v720, %v728
    %v764 = vunpack.c.l.b16 %v688
    %v765 = vunpack.c.h.b16 %v688
    %v766 = vunpack.c.l.b16 %v689
    %v767 = vunpack.c.h.b16 %v689
    %v768 = vunpack.c.l.b16 %v690
    %v769 = vunpack.c.h.b16 %v690
    %v770 = vunpack.c.l.b16 %v691
    %v771 = vunpack.c.h.b16 %v691
    %v772 = vunpack.c.l.b16 %v692
    %v773 = vunpack.c.h.b16 %v692
    %v774 = vunpack.c.l.b16 %v693
    %v775 = vunpack.c.h.b16 %v693
    %v776 = vunpack.c.l.b16 %v694
    %v777 = vunpack.c.h.b16 %v694
    %v778 = vunpack.c.l.b16 %v695
    %v779 = vunpack.c.h.b16 %v695
    %v780 = vunpack.c.l.b16 %v696
    %v781 = vunpack.c.h.b16 %v696
    %v782 = vunpack.c.l.b16 %v697
    %v783 = vunpack.c.h.b16 %v697
    %v784 = vunpack.c.l.b16 %v698
    %v785 = vunpack.c.h.b16 %v698
    %v786 = vunpack.c.l.b16 %v699
    %v787 = vunpack.c.h.b16 %v699
    %v788 = vunpack.c.l.b16 %v700
    %v789 = vunpack.c.h.b16 %v700
    %v790 = vunpack.c.l.b16 %v701
    %v791 = vunpack.c.h.b16 %v701
    %v792 = vunpack.c.l.b16 %v702
    %v793 = vunpack.c.h.b16 %v702
    %v794 = vunpack.c.l.b16 %v703
    %v795 = vunpack.c.h.b16 %v703
    %v796 = vunpack.c.l.b16 %v704
    %v797 = vunpack.c.h.b16 %v704
    %v798 = vunpack.c.l.b16 %v705
    %v799 = vunpack.c.h.b16 %v705
    %v800 = vunpack.c.l.b16 %v706
    %v801 = vunpack.c.h.b16 %v706
    %v802 = vunpack.c.l.b16 %v707
    %v803 = vunpack.c.h.b16 %v707
    %v804 = vunpack.c.l.b16 %v708
    %v805 = vunpack.c.h.b16 %v708
    %v806 = vunpack.c.l.b16 %v709
    %v807 = vunpack.c.h.b16 %v709
    %v808 = vunpack.c.l.b16 %v710
    %v809 = vunpack.c.h.b16 %v710
    %v810 = vunpack.c.l.b16 %v711
    %v811 = vunpack.c.h.b16 %v711
    %v812 = vunpack.c.l.b16 %v712
    %v813 = vunpack.c.h.b16 %v712
    %v814 = vunpack.c.l.b16 %v713
    %v815 = vunpack.c.h.b16 %v713
    %v816 = vunpack.c.l.b16 %v714
    %v817 = vunpack.c.h.b16 %v714
    %v818 = vunpack.c.l.b16 %v715
    %v819 = vunpack.c.h.b16 %v715
    %v820 = vunpack.c.l.b16 %v716
    %v821 = vunpack.c.h.b16 %v716
    %v822 = vunpack.c.l.b16 %v717
    %v823 = vunpack.c.h.b16 %v717
    %v824 = vunpack.c.l.b16 %v718
    %v825 = vunpack.c.h.b16 %v718
    %v826 = vunpack.c.l.b16 %v719
    %v827 = vunpack.c.h.b16 %v719
    %v828 = vpack.c.b16 %v766, %v764
    %v829 = vpack.c.b16 %v767, %v765
    %v830 = vpack.c.b16 %v770, %v768
    %v831 = vpack.c.b16 %v771, %v769
    %v832 = vpack.c.b16 %v774, %v772
    %v833 = vpack.c.b16 %v775, %v773
    %v834 = vpack.c.b16 %v778, %v776
    %v835 = vpack.c.b16 %v779, %v777
    %v836 = vpack.c.b16 %v782, %v780
    %v837 = vpack.c.b16 %v783, %v781
    %v838 = vpack.c.b16 %v786, %v784
    %v839 = vpack.c.b16 %v787, %v785
    %v840 = vpack.c.b16 %v790, %v788
    %v841 = vpack.c.b16 %v791, %v789
    %v842 = vpack.c.b16 %v794, %v792
    %v843 = vpack.c.b16 %v795, %v793
    %v844 = vpack.c.b16 %v798, %v796
    %v845 = vpack.c.b16 %v799, %v797
    %v846 = vpack.c.b16 %v802, %v800
    %v847 = vpack.c.b16 %v803, %v801
    %v848 = vpack.c.b16 %v806, %v804
    %v849 = vpack.c.b16 %v807, %v805
    %v850 = vpack.c.b16 %v810, %v808
    %v851 = vpack.c.b16 %v811, %v809
    %v852 = vpack.c.b16 %v814, %v812
    %v853 = vpack.c.b16 %v815, %v813
    %v854 = vpack.c.b16 %v818, %v816
    %v855 = vpack.c.b16 %v819, %v817
    %v856 = vpack.c.b16 %v822, %v820
    %v857 = vpack.c.b16 %v823, %v821
    %v858 = vpack.c.b16 %v826, %v824
    %v859 = vpack.c.b16 %v827, %v825
    %892 = vmatprep.subr.bf16.mxu0 %v829
    %893 = vmatpush1.bf16.msra.mxu0 %v828
    %894 = vmatprep.subr.bf16.mxu0 %v831
    %895 = vmatpush1.bf16.msra.mxu0 %v830
    %896 = vmatprep.subr.bf16.mxu0 %v833
    %897 = vmatpush1.bf16.msra.mxu0 %v832
    %898 = vmatprep.subr.bf16.mxu0 %v835
    %899 = vmatpush1.bf16.msra.mxu0 %v834
    %900 = vmatprep.subr.bf16.mxu0 %v837
    %901 = vmatpush1.bf16.msra.mxu0 %v836
    %902 = vmatprep.subr.bf16.mxu0 %v839
    %903 = vmatpush1.bf16.msra.mxu0 %v838
    %904 = vmatprep.subr.bf16.mxu0 %v841
    %905 = vmatpush1.bf16.msra.mxu0 %v840
    %906 = vmatprep.subr.bf16.mxu0 %v843
    %907 = vmatpush1.bf16.msra.mxu0 %v842
    %908 = vmatprep.subr.bf16.mxu0 %v845
    %909 = vmatpush1.bf16.msra.mxu0 %v844
    %910 = vmatprep.subr.bf16.mxu0 %v847
    %911 = vmatpush1.bf16.msra.mxu0 %v846
    %912 = vmatprep.subr.bf16.mxu0 %v849
    %913 = vmatpush1.bf16.msra.mxu0 %v848
    %914 = vmatprep.subr.bf16.mxu0 %v851
    %915 = vmatpush1.bf16.msra.mxu0 %v850
    %916 = vmatprep.subr.bf16.mxu0 %v853
    %917 = vmatpush1.bf16.msra.mxu0 %v852
    %918 = vmatprep.subr.bf16.mxu0 %v855
    %919 = vmatpush1.bf16.msra.mxu0 %v854
    %920 = vmatprep.subr.bf16.mxu0 %v857
    %921 = vmatpush1.bf16.msra.mxu0 %v856
    %922 = vmatprep.subr.bf16.mxu0 %v859
    %923 = vmatpush1.bf16.msra.mxu0 %v858
    %924 = vmatprep.mubr.bf16.mxu0 %v681
    %925 = vmatmul.mubr.bf16.gmra.mrb[0].mxu0 %v680
    %v926 = vpop.f32.mrb[0].mxu0
    %v927 = vadd.f32 %v725, %v926
    %v928 = vpop.f32.mrb[0].mxu0
    %v929 = vadd.f32 %v729, %v928
    %v930 = vpop.f32.mrb[0].mxu0
    %v931 = vadd.f32 %v725, %v930
    %v932 = vpop.f32.mrb[0].mxu0
    %v933 = vadd.f32 %v729, %v932
    %934 = vmatprep.mubr.bf16.mxu0 %v683
    %935 = vmatmul.mubr.bf16.gmra.mrb[0].mxu0 %v682
    %v936 = vpop.f32.mrb[0].mxu0
    %v937 = vadd.f32 %v725, %v936
    %v938 = vpop.f32.mrb[0].mxu0
    %v939 = vadd.f32 %v729, %v938
    %v940 = vpop.f32.mrb[0].mxu0
    %v941 = vadd.f32 %v725, %v940
    %v942 = vpop.f32.mrb[0].mxu0
    %v943 = vadd.f32 %v729, %v942
    %944 = vmatprep.mubr.bf16.mxu0 %v685
    %945 = vmatmul.mubr.bf16.gmra.mrb[0].mxu0 %v684
    %v946 = vpop.f32.mrb[0].mxu0
    %v947 = vadd.f32 %v725, %v946
    %v948 = vpop.f32.mrb[0].mxu0
    %v949 = vadd.f32 %v729, %v948
    %v950 = vpop.f32.mrb[0].mxu0
    %v951 = vadd.f32 %v725, %v950
    %v952 = vpop.f32.mrb[0].mxu0
    %v953 = vadd.f32 %v729, %v952
    %954 = vmatprep.mubr.bf16.mxu0 %v687
    %955 = vmatmul.mubr.bf16.gmra.mrb[0].mxu0 %v686
    %v956 = vpop.f32.mrb[0].mxu0
    %v957 = vadd.f32 %v725, %v956
    %v958 = vpop.f32.mrb[0].mxu0
    %v959 = vadd.f32 %v729, %v958
    %v960 = vpop.f32.mrb[0].mxu0
    %v961 = vadd.f32 %v725, %v960
    %v962 = vpop.f32.mrb[0].mxu0
    %v963 = vadd.f32 %v729, %v962
    %964 = vdwg.mxu0
    %v965 = vmax.f32 %v927, 0.0
    %v966 = vmax.f32 %v929, 0.0
    %v967 = vmax.f32 %v931, 0.0
    %v968 = vmax.f32 %v933, 0.0
    %v969 = vmax.f32 %v937, 0.0
    %v970 = vmax.f32 %v939, 0.0
    %v971 = vmax.f32 %v941, 0.0
    %v972 = vmax.f32 %v943, 0.0
    %v973 = vmax.f32 %v947, 0.0
    %v974 = vmax.f32 %v949, 0.0
    %v975 = vmax.f32 %v951, 0.0
    %v976 = vmax.f32 %v953, 0.0
    %v977 = vmax.f32 %v957, 0.0
    %v978 = vmax.f32 %v959, 0.0
    %v979 = vmax.f32 %v961, 0.0
    %v980 = vmax.f32 %v963, 0.0
    %v981 = vpack.c.bf16 %v967, %v965
    %v982 = vpack.c.bf16 %v968, %v966
    %v983 = vpack.c.bf16 %v971, %v969
    %v984 = vpack.c.bf16 %v972, %v970
    %v985 = vpack.c.bf16 %v975, %v973
    %v986 = vpack.c.bf16 %v976, %v974
    %v987 = vpack.c.bf16 %v979, %v977
    %v988 = vpack.c.bf16 %v980, %v978
    %v989 = vld [vmem:[#allocation11] sm:$0xff]
    %v990 = vld [vmem:[#allocation11 + $0x8] sm:$0xff]
    %v991 = vld [vmem:[#allocation11 + $0x10] sm:$0xff]
    %v992 = vld [vmem:[#allocation11 + $0x18] sm:$0xff]
    %v993 = vld [vmem:[#allocation11 + $0x20] sm:$0xff]
    %v994 = vld [vmem:[#allocation11 + $0x28] sm:$0xff]
    %v995 = vld [vmem:[#allocation11 + $0x30] sm:$0xff]
    %v996 = vld [vmem:[#allocation11 + $0x38] sm:$0xff]
    %v997 = vld [vmem:[#allocation11 + $0x40] sm:$0xff]
    %v998 = vld [vmem:[#allocation11 + $0x48] sm:$0xff]
    %v999 = vld [vmem:[#allocation11 + $0x50] sm:$0xff]
    %v1000 = vld [vmem:[#allocation11 + $0x58] sm:$0xff]
    %v1001 = vld [vmem:[#allocation11 + $0x60] sm:$0xff]
    %v1002 = vld [vmem:[#allocation11 + $0x68] sm:$0xff]
    %v1003 = vld [vmem:[#allocation11 + $0x70] sm:$0xff]
    %v1004 = vld [vmem:[#allocation11 + $0x78] sm:$0xff]
    %v1005 = vld [vmem:[#allocation11 + $0x80] sm:$0xff]
    %v1006 = vld [vmem:[#allocation11 + $0x88] sm:$0xff]
    %v1007 = vld [vmem:[#allocation11 + $0x90] sm:$0xff]
    %v1008 = vld [vmem:[#allocation11 + $0x98] sm:$0xff]
    %v1009 = vld [vmem:[#allocation11 + $0xa0] sm:$0xff]
    %v1010 = vld [vmem:[#allocation11 + $0xa8] sm:$0xff]
    %v1011 = vld [vmem:[#allocation11 + $0xb0] sm:$0xff]
    %v1012 = vld [vmem:[#allocation11 + $0xb8] sm:$0xff]
    %v1013 = vld [vmem:[#allocation11 + $0xc0] sm:$0xff]
    %v1014 = vld [vmem:[#allocation11 + $0xc8] sm:$0xff]
    %v1015 = vld [vmem:[#allocation11 + $0xd0] sm:$0xff]
    %v1016 = vld [vmem:[#allocation11 + $0xd8] sm:$0xff]
    %v1017 = vld [vmem:[#allocation11 + $0xe0] sm:$0xff]
    %v1018 = vld [vmem:[#allocation11 + $0xe8] sm:$0xff]
    %v1019 = vld [vmem:[#allocation11 + $0xf0] sm:$0xff]
    %v1020 = vld [vmem:[#allocation11 + $0xf8] sm:$0xff]
    %v1021 = vld [vmem:[#allocation5 + $0x9] sm:$0x3]
    %v1023 = vlaneseq
    %v1024 = vshrl.u32 %v1023, 7
    %v1025 = vsub.s32 0, %v1024
    %v1026 = vrot.slane %v1021, %v1025
    %v1027 = vlaneseq
    %v1028 = vshrl.u32 %v1027, 7
    %v1029 = vsub.s32 1, %v1028
    %v1030 = vrot.slane %v1021, %v1029
    %v1065 = vunpack.c.l.b16 %v989
    %v1066 = vunpack.c.h.b16 %v989
    %v1067 = vunpack.c.l.b16 %v990
    %v1068 = vunpack.c.h.b16 %v990
    %v1069 = vunpack.c.l.b16 %v991
    %v1070 = vunpack.c.h.b16 %v991
    %v1071 = vunpack.c.l.b16 %v992
    %v1072 = vunpack.c.h.b16 %v992
    %v1073 = vunpack.c.l.b16 %v993
    %v1074 = vunpack.c.h.b16 %v993
    %v1075 = vunpack.c.l.b16 %v994
    %v1076 = vunpack.c.h.b16 %v994
    %v1077 = vunpack.c.l.b16 %v995
    %v1078 = vunpack.c.h.b16 %v995
    %v1079 = vunpack.c.l.b16 %v996
    %v1080 = vunpack.c.h.b16 %v996
    %v1081 = vunpack.c.l.b16 %v997
    %v1082 = vunpack.c.h.b16 %v997
    %v1083 = vunpack.c.l.b16 %v998
    %v1084 = vunpack.c.h.b16 %v998
    %v1085 = vunpack.c.l.b16 %v999
    %v1086 = vunpack.c.h.b16 %v999
    %v1087 = vunpack.c.l.b16 %v1000
    %v1088 = vunpack.c.h.b16 %v1000
    %v1089 = vunpack.c.l.b16 %v1001
    %v1090 = vunpack.c.h.b16 %v1001
    %v1091 = vunpack.c.l.b16 %v1002
    %v1092 = vunpack.c.h.b16 %v1002
    %v1093 = vunpack.c.l.b16 %v1003
    %v1094 = vunpack.c.h.b16 %v1003
    %v1095 = vunpack.c.l.b16 %v1004
    %v1096 = vunpack.c.h.b16 %v1004
    %v1097 = vunpack.c.l.b16 %v1005
    %v1098 = vunpack.c.h.b16 %v1005
    %v1099 = vunpack.c.l.b16 %v1006
    %v1100 = vunpack.c.h.b16 %v1006
    %v1101 = vunpack.c.l.b16 %v1007
    %v1102 = vunpack.c.h.b16 %v1007
    %v1103 = vunpack.c.l.b16 %v1008
    %v1104 = vunpack.c.h.b16 %v1008
    %v1105 = vunpack.c.l.b16 %v1009
    %v1106 = vunpack.c.h.b16 %v1009
    %v1107 = vunpack.c.l.b16 %v1010
    %v1108 = vunpack.c.h.b16 %v1010
    %v1109 = vunpack.c.l.b16 %v1011
    %v1110 = vunpack.c.h.b16 %v1011
    %v1111 = vunpack.c.l.b16 %v1012
    %v1112 = vunpack.c.h.b16 %v1012
    %v1113 = vunpack.c.l.b16 %v1013
    %v1114 = vunpack.c.h.b16 %v1013
    %v1115 = vunpack.c.l.b16 %v1014
    %v1116 = vunpack.c.h.b16 %v1014
    %v1117 = vunpack.c.l.b16 %v1015
    %v1118 = vunpack.c.h.b16 %v1015
    %v1119 = vunpack.c.l.b16 %v1016
    %v1120 = vunpack.c.h.b16 %v1016
    %v1121 = vunpack.c.l.b16 %v1017
    %v1122 = vunpack.c.h.b16 %v1017
    %v1123 = vunpack.c.l.b16 %v1018
    %v1124 = vunpack.c.h.b16 %v1018
    %v1125 = vunpack.c.l.b16 %v1019
    %v1126 = vunpack.c.h.b16 %v1019
    %v1127 = vunpack.c.l.b16 %v1020
    %v1128 = vunpack.c.h.b16 %v1020
    %v1129 = vpack.c.b16 %v1067, %v1065
    %v1130 = vpack.c.b16 %v1068, %v1066
    %v1131 = vpack.c.b16 %v1071, %v1069
    %v1132 = vpack.c.b16 %v1072, %v1070
    %v1133 = vpack.c.b16 %v1075, %v1073
    %v1134 = vpack.c.b16 %v1076, %v1074
    %v1135 = vpack.c.b16 %v1079, %v1077
    %v1136 = vpack.c.b16 %v1080, %v1078
    %v1137 = vpack.c.b16 %v1083, %v1081
    %v1138 = vpack.c.b16 %v1084, %v1082
    %v1139 = vpack.c.b16 %v1087, %v1085
    %v1140 = vpack.c.b16 %v1088, %v1086
    %v1141 = vpack.c.b16 %v1091, %v1089
    %v1142 = vpack.c.b16 %v1092, %v1090
    %v1143 = vpack.c.b16 %v1095, %v1093
    %v1144 = vpack.c.b16 %v1096, %v1094
    %v1145 = vpack.c.b16 %v1099, %v1097
    %v1146 = vpack.c.b16 %v1100, %v1098
    %v1147 = vpack.c.b16 %v1103, %v1101
    %v1148 = vpack.c.b16 %v1104, %v1102
    %v1149 = vpack.c.b16 %v1107, %v1105
    %v1150 = vpack.c.b16 %v1108, %v1106
    %v1151 = vpack.c.b16 %v1111, %v1109
    %v1152 = vpack.c.b16 %v1112, %v1110
    %v1153 = vpack.c.b16 %v1115, %v1113
    %v1154 = vpack.c.b16 %v1116, %v1114
    %v1155 = vpack.c.b16 %v1119, %v1117
    %v1156 = vpack.c.b16 %v1120, %v1118
    %v1157 = vpack.c.b16 %v1123, %v1121
    %v1158 = vpack.c.b16 %v1124, %v1122
    %v1159 = vpack.c.b16 %v1127, %v1125
    %v1160 = vpack.c.b16 %v1128, %v1126
    %1193 = vmatprep.subr.bf16.mxu0 %v1130
    %1194 = vmatpush1.bf16.msra.mxu0 %v1129
    %1195 = vmatprep.subr.bf16.mxu0 %v1132
    %1196 = vmatpush1.bf16.msra.mxu0 %v1131
    %1197 = vmatprep.subr.bf16.mxu0 %v1134
    %1198 = vmatpush1.bf16.msra.mxu0 %v1133
    %1199 = vmatprep.subr.bf16.mxu0 %v1136
    %1200 = vmatpush1.bf16.msra.mxu0 %v1135
    %1201 = vmatprep.subr.bf16.mxu0 %v1138
    %1202 = vmatpush1.bf16.msra.mxu0 %v1137
    %1203 = vmatprep.subr.bf16.mxu0 %v1140
    %1204 = vmatpush1.bf16.msra.mxu0 %v1139
    %1205 = vmatprep.subr.bf16.mxu0 %v1142
    %1206 = vmatpush1.bf16.msra.mxu0 %v1141
    %1207 = vmatprep.subr.bf16.mxu0 %v1144
    %1208 = vmatpush1.bf16.msra.mxu0 %v1143
    %1209 = vmatprep.subr.bf16.mxu0 %v1146
    %1210 = vmatpush1.bf16.msra.mxu0 %v1145
    %1211 = vmatprep.subr.bf16.mxu0 %v1148
    %1212 = vmatpush1.bf16.msra.mxu0 %v1147
    %1213 = vmatprep.subr.bf16.mxu0 %v1150
    %1214 = vmatpush1.bf16.msra.mxu0 %v1149
    %1215 = vmatprep.subr.bf16.mxu0 %v1152
    %1216 = vmatpush1.bf16.msra.mxu0 %v1151
    %1217 = vmatprep.subr.bf16.mxu0 %v1154
    %1218 = vmatpush1.bf16.msra.mxu0 %v1153
    %1219 = vmatprep.subr.bf16.mxu0 %v1156
    %1220 = vmatpush1.bf16.msra.mxu0 %v1155
    %1221 = vmatprep.subr.bf16.mxu0 %v1158
    %1222 = vmatpush1.bf16.msra.mxu0 %v1157
    %1223 = vmatprep.subr.bf16.mxu0 %v1160
    %1224 = vmatpush1.bf16.msra.mxu0 %v1159
    %1225 = vmatprep.mubr.bf16.mxu0 %v982
    %1226 = vmatmul.mubr.bf16.gmra.mrb[0].mxu0 %v981
    %v1227 = vpop.f32.mrb[0].mxu0
    %v1228 = vadd.f32 %v1026, %v1227
    %v1229 = vpop.f32.mrb[0].mxu0
    %v1230 = vadd.f32 %v1030, %v1229
    %v1231 = vpop.f32.mrb[0].mxu0
    %v1232 = vadd.f32 %v1026, %v1231
    %v1233 = vpop.f32.mrb[0].mxu0
    %v1234 = vadd.f32 %v1030, %v1233
    %1235 = vmatprep.mubr.bf16.mxu0 %v984
    %1236 = vmatmul.mubr.bf16.gmra.mrb[0].mxu0 %v983
    %v1237 = vpop.f32.mrb[0].mxu0
    %v1238 = vadd.f32 %v1026, %v1237
    %v1239 = vpop.f32.mrb[0].mxu0
    %v1240 = vadd.f32 %v1030, %v1239
    %v1241 = vpop.f32.mrb[0].mxu0
    %v1242 = vadd.f32 %v1026, %v1241
    %v1243 = vpop.f32.mrb[0].mxu0
    %v1244 = vadd.f32 %v1030, %v1243
    %1245 = vmatprep.mubr.bf16.mxu0 %v986
    %1246 = vmatmul.mubr.bf16.gmra.mrb[0].mxu0 %v985
    %v1247 = vpop.f32.mrb[0].mxu0
    %v1248 = vadd.f32 %v1026, %v1247
    %v1249 = vpop.f32.mrb[0].mxu0
    %v1250 = vadd.f32 %v1030, %v1249
    %v1251 = vpop.f32.mrb[0].mxu0
    %v1252 = vadd.f32 %v1026, %v1251
    %v1253 = vpop.f32.mrb[0].mxu0
    %v1254 = vadd.f32 %v1030, %v1253
    %1255 = vmatprep.mubr.bf16.mxu0 %v988
    %1256 = vmatmul.mubr.bf16.gmra.mrb[0].mxu0 %v987
    %v1257 = vpop.f32.mrb[0].mxu0
    %v1258 = vadd.f32 %v1026, %v1257
    %v1259 = vpop.f32.mrb[0].mxu0
    %v1260 = vadd.f32 %v1030, %v1259
    %v1261 = vpop.f32.mrb[0].mxu0
    %v1262 = vadd.f32 %v1026, %v1261
    %v1263 = vpop.f32.mrb[0].mxu0
    %v1264 = vadd.f32 %v1030, %v1263
    %1265 = vdwg.mxu0
    %v1266 = vmax.f32 %v1228, 0.0
    %v1267 = vmax.f32 %v1230, 0.0
    %v1268 = vmax.f32 %v1232, 0.0
    %v1269 = vmax.f32 %v1234, 0.0
    %v1270 = vmax.f32 %v1238, 0.0
    %v1271 = vmax.f32 %v1240, 0.0
    %v1272 = vmax.f32 %v1242, 0.0
    %v1273 = vmax.f32 %v1244, 0.0
    %v1274 = vmax.f32 %v1248, 0.0
    %v1275 = vmax.f32 %v1250, 0.0
    %v1276 = vmax.f32 %v1252, 0.0
    %v1277 = vmax.f32 %v1254, 0.0
    %v1278 = vmax.f32 %v1258, 0.0
    %v1279 = vmax.f32 %v1260, 0.0
    %v1280 = vmax.f32 %v1262, 0.0
    %v1281 = vmax.f32 %v1264, 0.0
    %v1282 = vpack.c.bf16 %v1268, %v1266
    %v1283 = vpack.c.bf16 %v1269, %v1267
    %v1284 = vpack.c.bf16 %v1272, %v1270
    %v1285 = vpack.c.bf16 %v1273, %v1271
    %v1286 = vpack.c.bf16 %v1276, %v1274
    %v1287 = vpack.c.bf16 %v1277, %v1275
    %v1288 = vpack.c.bf16 %v1280, %v1278
    %v1289 = vpack.c.bf16 %v1281, %v1279
    %v1290 = vld [vmem:[#allocation13] sm:$0xff]
    %v1291 = vld [vmem:[#allocation13 + $0x8] sm:$0xff]
    %v1292 = vld [vmem:[#allocation13 + $0x10] sm:$0xff]
    %v1293 = vld [vmem:[#allocation13 + $0x18] sm:$0xff]
    %v1294 = vld [vmem:[#allocation13 + $0x20] sm:$0xff]
    %v1295 = vld [vmem:[#allocation13 + $0x28] sm:$0xff]
    %v1296 = vld [vmem:[#allocation13 + $0x30] sm:$0xff]
    %v1297 = vld [vmem:[#allocation13 + $0x38] sm:$0xff]
    %v1298 = vld [vmem:[#allocation13 + $0x40] sm:$0xff]
    %v1299 = vld [vmem:[#allocation13 + $0x48] sm:$0xff]
    %v1300 = vld [vmem:[#allocation13 + $0x50] sm:$0xff]
    %v1301 = vld [vmem:[#allocation13 + $0x58] sm:$0xff]
    %v1302 = vld [vmem:[#allocation13 + $0x60] sm:$0xff]
    %v1303 = vld [vmem:[#allocation13 + $0x68] sm:$0xff]
    %v1304 = vld [vmem:[#allocation13 + $0x70] sm:$0xff]
    %v1305 = vld [vmem:[#allocation13 + $0x78] sm:$0xff]
    %v1306 = vld [vmem:[#allocation13 + $0x80] sm:$0xff]
    %v1307 = vld [vmem:[#allocation13 + $0x88] sm:$0xff]
    %v1308 = vld [vmem:[#allocation13 + $0x90] sm:$0xff]
    %v1309 = vld [vmem:[#allocation13 + $0x98] sm:$0xff]
    %v1310 = vld [vmem:[#allocation13 + $0xa0] sm:$0xff]
    %v1311 = vld [vmem:[#allocation13 + $0xa8] sm:$0xff]
    %v1312 = vld [vmem:[#allocation13 + $0xb0] sm:$0xff]
    %v1313 = vld [vmem:[#allocation13 + $0xb8] sm:$0xff]
    %v1314 = vld [vmem:[#allocation13 + $0xc0] sm:$0xff]
    %v1315 = vld [vmem:[#allocation13 + $0xc8] sm:$0xff]
    %v1316 = vld [vmem:[#allocation13 + $0xd0] sm:$0xff]
    %v1317 = vld [vmem:[#allocation13 + $0xd8] sm:$0xff]
    %v1318 = vld [vmem:[#allocation13 + $0xe0] sm:$0xff]
    %v1319 = vld [vmem:[#allocation13 + $0xe8] sm:$0xff]
    %v1320 = vld [vmem:[#allocation13 + $0xf0] sm:$0xff]
    %v1321 = vld [vmem:[#allocation13 + $0xf8] sm:$0xff]
    %v1322 = vld [vmem:[#allocation5 + $0xb] sm:$0x3]
    %v1324 = vlaneseq
    %v1325 = vshrl.u32 %v1324, 7
    %v1326 = vsub.s32 0, %v1325
    %v1327 = vrot.slane %v1322, %v1326
    %v1328 = vlaneseq
    %v1329 = vshrl.u32 %v1328, 7
    %v1330 = vsub.s32 1, %v1329
    %v1331 = vrot.slane %v1322, %v1330
    %v1366 = vunpack.c.l.b16 %v1290
    %v1367 = vunpack.c.h.b16 %v1290
    %v1368 = vunpack.c.l.b16 %v1291
    %v1369 = vunpack.c.h.b16 %v1291
    %v1370 = vunpack.c.l.b16 %v1292
    %v1371 = vunpack.c.h.b16 %v1292
    %v1372 = vunpack.c.l.b16 %v1293
    %v1373 = vunpack.c.h.b16 %v1293
    %v1374 = vunpack.c.l.b16 %v1294
    %v1375 = vunpack.c.h.b16 %v1294
    %v1376 = vunpack.c.l.b16 %v1295
    %v1377 = vunpack.c.h.b16 %v1295
    %v1378 = vunpack.c.l.b16 %v1296
    %v1379 = vunpack.c.h.b16 %v1296
    %v1380 = vunpack.c.l.b16 %v1297
    %v1381 = vunpack.c.h.b16 %v1297
    %v1382 = vunpack.c.l.b16 %v1298
    %v1383 = vunpack.c.h.b16 %v1298
    %v1384 = vunpack.c.l.b16 %v1299
    %v1385 = vunpack.c.h.b16 %v1299
    %v1386 = vunpack.c.l.b16 %v1300
    %v1387 = vunpack.c.h.b16 %v1300
    %v1388 = vunpack.c.l.b16 %v1301
    %v1389 = vunpack.c.h.b16 %v1301
    %v1390 = vunpack.c.l.b16 %v1302
    %v1391 = vunpack.c.h.b16 %v1302
    %v1392 = vunpack.c.l.b16 %v1303
    %v1393 = vunpack.c.h.b16 %v1303
    %v1394 = vunpack.c.l.b16 %v1304
    %v1395 = vunpack.c.h.b16 %v1304
    %v1396 = vunpack.c.l.b16 %v1305
    %v1397 = vunpack.c.h.b16 %v1305
    %v1398 = vunpack.c.l.b16 %v1306
    %v1399 = vunpack.c.h.b16 %v1306
    %v1400 = vunpack.c.l.b16 %v1307
    %v1401 = vunpack.c.h.b16 %v1307
    %v1402 = vunpack.c.l.b16 %v1308
    %v1403 = vunpack.c.h.b16 %v1308
    %v1404 = vunpack.c.l.b16 %v1309
    %v1405 = vunpack.c.h.b16 %v1309
    %v1406 = vunpack.c.l.b16 %v1310
    %v1407 = vunpack.c.h.b16 %v1310
    %v1408 = vunpack.c.l.b16 %v1311
    %v1409 = vunpack.c.h.b16 %v1311
    %v1410 = vunpack.c.l.b16 %v1312
    %v1411 = vunpack.c.h.b16 %v1312
    %v1412 = vunpack.c.l.b16 %v1313
    %v1413 = vunpack.c.h.b16 %v1313
    %v1414 = vunpack.c.l.b16 %v1314
    %v1415 = vunpack.c.h.b16 %v1314
    %v1416 = vunpack.c.l.b16 %v1315
    %v1417 = vunpack.c.h.b16 %v1315
    %v1418 = vunpack.c.l.b16 %v1316
    %v1419 = vunpack.c.h.b16 %v1316
    %v1420 = vunpack.c.l.b16 %v1317
    %v1421 = vunpack.c.h.b16 %v1317
    %v1422 = vunpack.c.l.b16 %v1318
    %v1423 = vunpack.c.h.b16 %v1318
    %v1424 = vunpack.c.l.b16 %v1319
    %v1425 = vunpack.c.h.b16 %v1319
    %v1426 = vunpack.c.l.b16 %v1320
    %v1427 = vunpack.c.h.b16 %v1320
    %v1428 = vunpack.c.l.b16 %v1321
    %v1429 = vunpack.c.h.b16 %v1321
    %v1430 = vpack.c.b16 %v1368, %v1366
    %v1431 = vpack.c.b16 %v1369, %v1367
    %v1432 = vpack.c.b16 %v1372, %v1370
    %v1433 = vpack.c.b16 %v1373, %v1371
    %v1434 = vpack.c.b16 %v1376, %v1374
    %v1435 = vpack.c.b16 %v1377, %v1375
    %v1436 = vpack.c.b16 %v1380, %v1378
    %v1437 = vpack.c.b16 %v1381, %v1379
    %v1438 = vpack.c.b16 %v1384, %v1382
    %v1439 = vpack.c.b16 %v1385, %v1383
    %v1440 = vpack.c.b16 %v1388, %v1386
    %v1441 = vpack.c.b16 %v1389, %v1387
    %v1442 = vpack.c.b16 %v1392, %v1390
    %v1443 = vpack.c.b16 %v1393, %v1391
    %v1444 = vpack.c.b16 %v1396, %v1394
    %v1445 = vpack.c.b16 %v1397, %v1395
    %v1446 = vpack.c.b16 %v1400, %v1398
    %v1447 = vpack.c.b16 %v1401, %v1399
    %v1448 = vpack.c.b16 %v1404, %v1402
    %v1449 = vpack.c.b16 %v1405, %v1403
    %v1450 = vpack.c.b16 %v1408, %v1406
    %v1451 = vpack.c.b16 %v1409, %v1407
    %v1452 = vpack.c.b16 %v1412, %v1410
    %v1453 = vpack.c.b16 %v1413, %v1411
    %v1454 = vpack.c.b16 %v1416, %v1414
    %v1455 = vpack.c.b16 %v1417, %v1415
    %v1456 = vpack.c.b16 %v1420, %v1418
    %v1457 = vpack.c.b16 %v1421, %v1419
    %v1458 = vpack.c.b16 %v1424, %v1422
    %v1459 = vpack.c.b16 %v1425, %v1423
    %v1460 = vpack.c.b16 %v1428, %v1426
    %v1461 = vpack.c.b16 %v1429, %v1427
    %1494 = vmatprep.subr.bf16.mxu0 %v1431
    %1495 = vmatpush1.bf16.msra.mxu0 %v1430
    %1496 = vmatprep.subr.bf16.mxu0 %v1433
    %1497 = vmatpush1.bf16.msra.mxu0 %v1432
    %1498 = vmatprep.subr.bf16.mxu0 %v1435
    %1499 = vmatpush1.bf16.msra.mxu0 %v1434
    %1500 = vmatprep.subr.bf16.mxu0 %v1437
    %1501 = vmatpush1.bf16.msra.mxu0 %v1436
    %1502 = vmatprep.subr.bf16.mxu0 %v1439
    %1503 = vmatpush1.bf16.msra.mxu0 %v1438
    %1504 = vmatprep.subr.bf16.mxu0 %v1441
    %1505 = vmatpush1.bf16.msra.mxu0 %v1440
    %1506 = vmatprep.subr.bf16.mxu0 %v1443
    %1507 = vmatpush1.bf16.msra.mxu0 %v1442
    %1508 = vmatprep.subr.bf16.mxu0 %v1445
    %1509 = vmatpush1.bf16.msra.mxu0 %v1444
    %1510 = vmatprep.subr.bf16.mxu0 %v1447
    %1511 = vmatpush1.bf16.msra.mxu0 %v1446
    %1512 = vmatprep.subr.bf16.mxu0 %v1449
    %1513 = vmatpush1.bf16.msra.mxu0 %v1448
    %1514 = vmatprep.subr.bf16.mxu0 %v1451
    %1515 = vmatpush1.bf16.msra.mxu0 %v1450
    %1516 = vmatprep.subr.bf16.mxu0 %v1453
    %1517 = vmatpush1.bf16.msra.mxu0 %v1452
    %1518 = vmatprep.subr.bf16.mxu0 %v1455
    %1519 = vmatpush1.bf16.msra.mxu0 %v1454
    %1520 = vmatprep.subr.bf16.mxu0 %v1457
    %1521 = vmatpush1.bf16.msra.mxu0 %v1456
    %1522 = vmatprep.subr.bf16.mxu0 %v1459
    %1523 = vmatpush1.bf16.msra.mxu0 %v1458
    %1524 = vmatprep.subr.bf16.mxu0 %v1461
    %1525 = vmatpush1.bf16.msra.mxu0 %v1460
    %1526 = vmatprep.mubr.bf16.mxu0 %v1283
    %1527 = vmatmul.mubr.bf16.gmra.mrb[0].mxu0 %v1282
    %v1528 = vpop.f32.mrb[0].mxu0
    %v1529 = vadd.f32 %v1327, %v1528
    %v1530 = vpop.f32.mrb[0].mxu0
    %v1531 = vadd.f32 %v1331, %v1530
    %v1532 = vpop.f32.mrb[0].mxu0
    %v1533 = vadd.f32 %v1327, %v1532
    %v1534 = vpop.f32.mrb[0].mxu0
    %v1535 = vadd.f32 %v1331, %v1534
    %1536 = vmatprep.mubr.bf16.mxu0 %v1285
    %1537 = vmatmul.mubr.bf16.gmra.mrb[0].mxu0 %v1284
    %v1538 = vpop.f32.mrb[0].mxu0
    %v1539 = vadd.f32 %v1327, %v1538
    %v1540 = vpop.f32.mrb[0].mxu0
    %v1541 = vadd.f32 %v1331, %v1540
    %v1542 = vpop.f32.mrb[0].mxu0
    %v1543 = vadd.f32 %v1327, %v1542
    %v1544 = vpop.f32.mrb[0].mxu0
    %v1545 = vadd.f32 %v1331, %v1544
    %1546 = vmatprep.mubr.bf16.mxu0 %v1287
    %1547 = vmatmul.mubr.bf16.gmra.mrb[0].mxu0 %v1286
    %v1548 = vpop.f32.mrb[0].mxu0
    %v1549 = vadd.f32 %v1327, %v1548
    %v1550 = vpop.f32.mrb[0].mxu0
    %v1551 = vadd.f32 %v1331, %v1550
    %v1552 = vpop.f32.mrb[0].mxu0
    %v1553 = vadd.f32 %v1327, %v1552
    %v1554 = vpop.f32.mrb[0].mxu0
    %v1555 = vadd.f32 %v1331, %v1554
    %1556 = vmatprep.mubr.bf16.mxu0 %v1289
    %1557 = vmatmul.mubr.bf16.gmra.mrb[0].mxu0 %v1288
    %v1558 = vpop.f32.mrb[0].mxu0
    %v1559 = vadd.f32 %v1327, %v1558
    %v1560 = vpop.f32.mrb[0].mxu0
    %v1561 = vadd.f32 %v1331, %v1560
    %v1562 = vpop.f32.mrb[0].mxu0
    %v1563 = vadd.f32 %v1327, %v1562
    %v1564 = vpop.f32.mrb[0].mxu0
    %v1565 = vadd.f32 %v1331, %v1564
    %1566 = vdwg.mxu0
    %v1567 = vadd.f32 %v1529, %v1533
    %v1568 = vadd.f32 %v1567, %v1539
    %v1569 = vadd.f32 %v1568, %v1543
    %v1570 = vadd.f32 %v1569, %v1549
    %v1571 = vadd.f32 %v1570, %v1553
    %v1572 = vadd.f32 %v1571, %v1559
    %v1573 = vadd.f32 %v1572, %v1563
    %v1574 = vrot.slane %v1573, 4
    %v1575 = vadd.f32 %v1573, %v1574
    %v1576 = vrot.slane %v1575, 2
    %v1577 = vadd.f32 %v1575, %v1576
    %v1578 = vrot.slane %v1577, 1
    %v1579 = vadd.f32 %v1577, %v1578
    %v1580 = vadd.f32 %v1531, %v1535
    %v1581 = vadd.f32 %v1580, %v1541
    %v1582 = vadd.f32 %v1581, %v1545
    %v1583 = vadd.f32 %v1582, %v1551
    %v1584 = vadd.f32 %v1583, %v1555
    %v1585 = vadd.f32 %v1584, %v1561
    %v1586 = vadd.f32 %v1585, %v1565
    %v1587 = vrot.slane %v1586, 4
    %v1588 = vadd.f32 %v1586, %v1587
    %v1589 = vrot.slane %v1588, 2
    %v1590 = vadd.f32 %v1588, %v1589
    %v1591 = vrot.slane %v1590, 1
    %v1592 = vadd.f32 %v1590, %v1591
    %v1593 = vmul.f32 %v1579, %v538
    %v1594 = vmul.f32 %v1592, %v538
    %v1595 = vsub.f32 %v1529, %v1593
    %v1596 = vsub.f32 %v1531, %v1594
    %v1597 = vsub.f32 %v1533, %v1593
    %v1598 = vsub.f32 %v1535, %v1594
    %v1599 = vsub.f32 %v1539, %v1593
    %v1600 = vsub.f32 %v1541, %v1594
    %v1601 = vsub.f32 %v1543, %v1593
    %v1602 = vsub.f32 %v1545, %v1594
    %v1603 = vsub.f32 %v1549, %v1593
    %v1604 = vsub.f32 %v1551, %v1594
    %v1605 = vsub.f32 %v1553, %v1593
    %v1606 = vsub.f32 %v1555, %v1594
    %v1607 = vsub.f32 %v1559, %v1593
    %v1608 = vsub.f32 %v1561, %v1594
    %v1609 = vsub.f32 %v1563, %v1593
    %v1610 = vsub.f32 %v1565, %v1594
    %v1611 = vmul.f32 %v1595, %v1595
    %v1612 = vmul.f32 %v1596, %v1596
    %v1613 = vmul.f32 %v1597, %v1597
    %v1614 = vmul.f32 %v1598, %v1598
    %v1615 = vmul.f32 %v1599, %v1599
    %v1616 = vmul.f32 %v1600, %v1600
    %v1617 = vmul.f32 %v1601, %v1601
    %v1618 = vmul.f32 %v1602, %v1602
    %v1619 = vmul.f32 %v1603, %v1603
    %v1620 = vmul.f32 %v1604, %v1604
    %v1621 = vmul.f32 %v1605, %v1605
    %v1622 = vmul.f32 %v1606, %v1606
    %v1623 = vmul.f32 %v1607, %v1607
    %v1624 = vmul.f32 %v1608, %v1608
    %v1625 = vmul.f32 %v1609, %v1609
    %v1626 = vmul.f32 %v1610, %v1610
    %v1627 = vadd.f32 %v1611, %v1613
    %v1628 = vadd.f32 %v1627, %v1615
    %v1629 = vadd.f32 %v1628, %v1617
    %v1630 = vadd.f32 %v1629, %v1619
    %v1631 = vadd.f32 %v1630, %v1621
    %v1632 = vadd.f32 %v1631, %v1623
    %v1633 = vadd.f32 %v1632, %v1625
    %v1634 = vrot.slane %v1633, 4
    %v1635 = vadd.f32 %v1633, %v1634
    %v1636 = vrot.slane %v1635, 2
    %v1637 = vadd.f32 %v1635, %v1636
    %v1638 = vrot.slane %v1637, 1
    %v1639 = vadd.f32 %v1637, %v1638
    %v1640 = vadd.f32 %v1612, %v1614
    %v1641 = vadd.f32 %v1640, %v1616
    %v1642 = vadd.f32 %v1641, %v1618
    %v1643 = vadd.f32 %v1642, %v1620
    %v1644 = vadd.f32 %v1643, %v1622
    %v1645 = vadd.f32 %v1644, %v1624
    %v1646 = vadd.f32 %v1645, %v1626
    %v1647 = vrot.slane %v1646, 4
    %v1648 = vadd.f32 %v1646, %v1647
    %v1649 = vrot.slane %v1648, 2
    %v1650 = vadd.f32 %v1648, %v1649
    %v1651 = vrot.slane %v1650, 1
    %v1652 = vadd.f32 %v1650, %v1651
    %v1653 = vmul.f32 %v1639, %v538
    %v1654 = vmul.f32 %v1652, %v538
    %v1655 = vld [vmem:[#allocation5 + $0xd] sm:$0x3]
    %v1656 = vadd.f32 %v1653, 1e-05
    %v1657 = vadd.f32 %v1654, 1e-05
    %v1658 = vrsqrt.pop %v1656
    %v1659 = vrsqrt.pop %v1657
    %v1662 = vcombine.low %v1658, %v1659
    %v1664 = vunpack.c.l.s4 1966171168
    %v1665 = vunpack.c.0.s8 %v1664
    %v1666 = vlaneseq
    %v1667 = vshrl.u32 %v1666, 7
    %v1668 = vsub.s32 %v1665, %v1667
    %v1669 = vrot.slane %v1662, %v1668
    %v1671 = vunpack.c.l.s4 1966171168
    %v1672 = vunpack.c.0.s8 %v1671
    %v1673 = vlaneseq
    %v1674 = vshrl.u32 %v1673, 7
    %v1675 = vsub.s32 %v1672, %v1674
    %v1676 = vrot.slane %v1669, %v1675
    %v1678 = vmul.f32 %v1655, %v1676
    %v1680 = vlaneseq
    %v1681 = vshrl.u32 %v1680, 7
    %v1682 = vsub.s32 0, %v1681
    %v1683 = vrot.slane %v1678, %v1682
    %v1684 = vlaneseq
    %v1685 = vshrl.u32 %v1684, 7
    %v1686 = vsub.s32 1, %v1685
    %v1687 = vrot.slane %v1678, %v1686
    %v1690 = vmul.f32 %v1595, %v1683
    %v1691 = vmul.f32 %v1596, %v1687
    %v1692 = vmul.f32 %v1597, %v1683
    %v1693 = vmul.f32 %v1598, %v1687
    %v1694 = vmul.f32 %v1599, %v1683
    %v1695 = vmul.f32 %v1600, %v1687
    %v1696 = vmul.f32 %v1601, %v1683
    %v1697 = vmul.f32 %v1602, %v1687
    %v1698 = vmul.f32 %v1603, %v1683
    %v1699 = vmul.f32 %v1604, %v1687
    %v1700 = vmul.f32 %v1605, %v1683
    %v1701 = vmul.f32 %v1606, %v1687
    %v1702 = vmul.f32 %v1607, %v1683
    %v1703 = vmul.f32 %v1608, %v1687
    %v1704 = vmul.f32 %v1609, %v1683
    %v1705 = vmul.f32 %v1610, %v1687
    %v1706 = vld [vmem:[#allocation5 + $0xf] sm:$0x3]
    %v1708 = vlaneseq
    %v1709 = vshrl.u32 %v1708, 7
    %v1710 = vsub.s32 0, %v1709
    %v1711 = vrot.slane %v1706, %v1710
    %v1712 = vlaneseq
    %v1713 = vshrl.u32 %v1712, 7
    %v1714 = vsub.s32 1, %v1713
    %v1715 = vrot.slane %v1706, %v1714
    %v1718 = vadd.f32 %v1690, %v1711
    %v1719 = vadd.f32 %v1691, %v1715
    %v1720 = vadd.f32 %v1692, %v1711
    %v1721 = vadd.f32 %v1693, %v1715
    %v1722 = vadd.f32 %v1694, %v1711
    %v1723 = vadd.f32 %v1695, %v1715
    %v1724 = vadd.f32 %v1696, %v1711
    %v1725 = vadd.f32 %v1697, %v1715
    %v1726 = vadd.f32 %v1698, %v1711
    %v1727 = vadd.f32 %v1699, %v1715
    %v1728 = vadd.f32 %v1700, %v1711
    %v1729 = vadd.f32 %v1701, %v1715
    %v1730 = vadd.f32 %v1702, %v1711
    %v1731 = vadd.f32 %v1703, %v1715
    %v1732 = vadd.f32 %v1704, %v1711
    %v1733 = vadd.f32 %v1705, %v1715
    %v1734 = vmax.f32 %v1718, 0.0
    %v1735 = vmax.f32 %v1719, 0.0
    %v1736 = vmax.f32 %v1720, 0.0
    %v1737 = vmax.f32 %v1721, 0.0
    %v1738 = vmax.f32 %v1722, 0.0
    %v1739 = vmax.f32 %v1723, 0.0
    %v1740 = vmax.f32 %v1724, 0.0
    %v1741 = vmax.f32 %v1725, 0.0
    %v1742 = vmax.f32 %v1726, 0.0
    %v1743 = vmax.f32 %v1727, 0.0
    %v1744 = vmax.f32 %v1728, 0.0
    %v1745 = vmax.f32 %v1729, 0.0
    %v1746 = vmax.f32 %v1730, 0.0
    %v1747 = vmax.f32 %v1731, 0.0
    %v1748 = vmax.f32 %v1732, 0.0
    %v1749 = vmax.f32 %v1733, 0.0
    %v1750 = vpack.c.bf16 %v1736, %v1734
    %v1751 = vpack.c.bf16 %v1737, %v1735
    %v1752 = vpack.c.bf16 %v1740, %v1738
    %v1753 = vpack.c.bf16 %v1741, %v1739
    %v1754 = vpack.c.bf16 %v1744, %v1742
    %v1755 = vpack.c.bf16 %v1745, %v1743
    %v1756 = vpack.c.bf16 %v1748, %v1746
    %v1757 = vpack.c.bf16 %v1749, %v1747
    %v1758 = vld [vmem:[#allocation14] sm:$0xff]
    %v1759 = vld [vmem:[#allocation14 + $0x8] sm:$0xff]
    %v1760 = vld [vmem:[#allocation14 + $0x10] sm:$0xff]
    %v1761 = vld [vmem:[#allocation14 + $0x18] sm:$0xff]
    %v1762 = vld [vmem:[#allocation14 + $0x20] sm:$0xff]
    %v1763 = vld [vmem:[#allocation14 + $0x28] sm:$0xff]
    %v1764 = vld [vmem:[#allocation14 + $0x30] sm:$0xff]
    %v1765 = vld [vmem:[#allocation14 + $0x38] sm:$0xff]
    %v1766 = vld [vmem:[#allocation14 + $0x40] sm:$0xff]
    %v1767 = vld [vmem:[#allocation14 + $0x48] sm:$0xff]
    %v1768 = vld [vmem:[#allocation14 + $0x50] sm:$0xff]
    %v1769 = vld [vmem:[#allocation14 + $0x58] sm:$0xff]
    %v1770 = vld [vmem:[#allocation14 + $0x60] sm:$0xff]
    %v1771 = vld [vmem:[#allocation14 + $0x68] sm:$0xff]
    %v1772 = vld [vmem:[#allocation14 + $0x70] sm:$0xff]
    %v1773 = vld [vmem:[#allocation14 + $0x78] sm:$0xff]
    %v1774 = vld [vmem:[#allocation14 + $0x80] sm:$0xff]
    %v1775 = vld [vmem:[#allocation14 + $0x88] sm:$0xff]
    %v1776 = vld [vmem:[#allocation14 + $0x90] sm:$0xff]
    %v1777 = vld [vmem:[#allocation14 + $0x98] sm:$0xff]
    %v1778 = vld [vmem:[#allocation14 + $0xa0] sm:$0xff]
    %v1779 = vld [vmem:[#allocation14 + $0xa8] sm:$0xff]
    %v1780 = vld [vmem:[#allocation14 + $0xb0] sm:$0xff]
    %v1781 = vld [vmem:[#allocation14 + $0xb8] sm:$0xff]
    %v1782 = vld [vmem:[#allocation14 + $0xc0] sm:$0xff]
    %v1783 = vld [vmem:[#allocation14 + $0xc8] sm:$0xff]
    %v1784 = vld [vmem:[#allocation14 + $0xd0] sm:$0xff]
    %v1785 = vld [vmem:[#allocation14 + $0xd8] sm:$0xff]
    %v1786 = vld [vmem:[#allocation14 + $0xe0] sm:$0xff]
    %v1787 = vld [vmem:[#allocation14 + $0xe8] sm:$0xff]
    %v1788 = vld [vmem:[#allocation14 + $0xf0] sm:$0xff]
    %v1789 = vld [vmem:[#allocation14 + $0xf8] sm:$0xff]
    %v1790 = vld [vmem:[#allocation5 + $0x11] sm:$0x3]
    %v1792 = vlaneseq
    %v1793 = vshrl.u32 %v1792, 7
    %v1794 = vsub.s32 0, %v1793
    %v1795 = vrot.slane %v1790, %v1794
    %v1796 = vlaneseq
    %v1797 = vshrl.u32 %v1796, 7
    %v1798 = vsub.s32 1, %v1797
    %v1799 = vrot.slane %v1790, %v1798
    %v1834 = vunpack.c.l.b16 %v1758
    %v1835 = vunpack.c.h.b16 %v1758
    %v1836 = vunpack.c.l.b16 %v1759
    %v1837 = vunpack.c.h.b16 %v1759
    %v1838 = vunpack.c.l.b16 %v1760
    %v1839 = vunpack.c.h.b16 %v1760
    %v1840 = vunpack.c.l.b16 %v1761
    %v1841 = vunpack.c.h.b16 %v1761
    %v1842 = vunpack.c.l.b16 %v1762
    %v1843 = vunpack.c.h.b16 %v1762
    %v1844 = vunpack.c.l.b16 %v1763
    %v1845 = vunpack.c.h.b16 %v1763
    %v1846 = vunpack.c.l.b16 %v1764
    %v1847 = vunpack.c.h.b16 %v1764
    %v1848 = vunpack.c.l.b16 %v1765
    %v1849 = vunpack.c.h.b16 %v1765
    %v1850 = vunpack.c.l.b16 %v1766
    %v1851 = vunpack.c.h.b16 %v1766
    %v1852 = vunpack.c.l.b16 %v1767
    %v1853 = vunpack.c.h.b16 %v1767
    %v1854 = vunpack.c.l.b16 %v1768
    %v1855 = vunpack.c.h.b16 %v1768
    %v1856 = vunpack.c.l.b16 %v1769
    %v1857 = vunpack.c.h.b16 %v1769
    %v1858 = vunpack.c.l.b16 %v1770
    %v1859 = vunpack.c.h.b16 %v1770
    %v1860 = vunpack.c.l.b16 %v1771
    %v1861 = vunpack.c.h.b16 %v1771
    %v1862 = vunpack.c.l.b16 %v1772
    %v1863 = vunpack.c.h.b16 %v1772
    %v1864 = vunpack.c.l.b16 %v1773
    %v1865 = vunpack.c.h.b16 %v1773
    %v1866 = vunpack.c.l.b16 %v1774
    %v1867 = vunpack.c.h.b16 %v1774
    %v1868 = vunpack.c.l.b16 %v1775
    %v1869 = vunpack.c.h.b16 %v1775
    %v1870 = vunpack.c.l.b16 %v1776
    %v1871 = vunpack.c.h.b16 %v1776
    %v1872 = vunpack.c.l.b16 %v1777
    %v1873 = vunpack.c.h.b16 %v1777
    %v1874 = vunpack.c.l.b16 %v1778
    %v1875 = vunpack.c.h.b16 %v1778
    %v1876 = vunpack.c.l.b16 %v1779
    %v1877 = vunpack.c.h.b16 %v1779
    %v1878 = vunpack.c.l.b16 %v1780
    %v1879 = vunpack.c.h.b16 %v1780
    %v1880 = vunpack.c.l.b16 %v1781
    %v1881 = vunpack.c.h.b16 %v1781
    %v1882 = vunpack.c.l.b16 %v1782
    %v1883 = vunpack.c.h.b16 %v1782
    %v1884 = vunpack.c.l.b16 %v1783
    %v1885 = vunpack.c.h.b16 %v1783
    %v1886 = vunpack.c.l.b16 %v1784
    %v1887 = vunpack.c.h.b16 %v1784
    %v1888 = vunpack.c.l.b16 %v1785
    %v1889 = vunpack.c.h.b16 %v1785
    %v1890 = vunpack.c.l.b16 %v1786
    %v1891 = vunpack.c.h.b16 %v1786
    %v1892 = vunpack.c.l.b16 %v1787
    %v1893 = vunpack.c.h.b16 %v1787
    %v1894 = vunpack.c.l.b16 %v1788
    %v1895 = vunpack.c.h.b16 %v1788
    %v1896 = vunpack.c.l.b16 %v1789
    %v1897 = vunpack.c.h.b16 %v1789
    %v1898 = vpack.c.b16 %v1836, %v1834
    %v1899 = vpack.c.b16 %v1837, %v1835
    %v1900 = vpack.c.b16 %v1840, %v1838
    %v1901 = vpack.c.b16 %v1841, %v1839
    %v1902 = vpack.c.b16 %v1844, %v1842
    %v1903 = vpack.c.b16 %v1845, %v1843
    %v1904 = vpack.c.b16 %v1848, %v1846
    %v1905 = vpack.c.b16 %v1849, %v1847
    %v1906 = vpack.c.b16 %v1852, %v1850
    %v1907 = vpack.c.b16 %v1853, %v1851
    %v1908 = vpack.c.b16 %v1856, %v1854
    %v1909 = vpack.c.b16 %v1857, %v1855
    %v1910 = vpack.c.b16 %v1860, %v1858
    %v1911 = vpack.c.b16 %v1861, %v1859
    %v1912 = vpack.c.b16 %v1864, %v1862
    %v1913 = vpack.c.b16 %v1865, %v1863
    %v1914 = vpack.c.b16 %v1868, %v1866
    %v1915 = vpack.c.b16 %v1869, %v1867
    %v1916 = vpack.c.b16 %v1872, %v1870
    %v1917 = vpack.c.b16 %v1873, %v1871
    %v1918 = vpack.c.b16 %v1876, %v1874
    %v1919 = vpack.c.b16 %v1877, %v1875
    %v1920 = vpack.c.b16 %v1880, %v1878
    %v1921 = vpack.c.b16 %v1881, %v1879
    %v1922 = vpack.c.b16 %v1884, %v1882
    %v1923 = vpack.c.b16 %v1885, %v1883
    %v1924 = vpack.c.b16 %v1888, %v1886
    %v1925 = vpack.c.b16 %v1889, %v1887
    %v1926 = vpack.c.b16 %v1892, %v1890
    %v1927 = vpack.c.b16 %v1893, %v1891
    %v1928 = vpack.c.b16 %v1896, %v1894
    %v1929 = vpack.c.b16 %v1897, %v1895
    %1962 = vmatprep.subr.bf16.mxu0 %v1899
    %1963 = vmatpush1.bf16.msra.mxu0 %v1898
    %1964 = vmatprep.subr.bf16.mxu0 %v1901
    %1965 = vmatpush1.bf16.msra.mxu0 %v1900
    %1966 = vmatprep.subr.bf16.mxu0 %v1903
    %1967 = vmatpush1.bf16.msra.mxu0 %v1902
    %1968 = vmatprep.subr.bf16.mxu0 %v1905
    %1969 = vmatpush1.bf16.msra.mxu0 %v1904
    %1970 = vmatprep.subr.bf16.mxu0 %v1907
    %1971 = vmatpush1.bf16.msra.mxu0 %v1906
    %1972 = vmatprep.subr.bf16.mxu0 %v1909
    %1973 = vmatpush1.bf16.msra.mxu0 %v1908
    %1974 = vmatprep.subr.bf16.mxu0 %v1911
    %1975 = vmatpush1.bf16.msra.mxu0 %v1910
    %1976 = vmatprep.subr.bf16.mxu0 %v1913
    %1977 = vmatpush1.bf16.msra.mxu0 %v1912
    %1978 = vmatprep.subr.bf16.mxu0 %v1915
    %1979 = vmatpush1.bf16.msra.mxu0 %v1914
    %1980 = vmatprep.subr.bf16.mxu0 %v1917
    %1981 = vmatpush1.bf16.msra.mxu0 %v1916
    %1982 = vmatprep.subr.bf16.mxu0 %v1919
    %1983 = vmatpush1.bf16.msra.mxu0 %v1918
    %1984 = vmatprep.subr.bf16.mxu0 %v1921
    %1985 = vmatpush1.bf16.msra.mxu0 %v1920
    %1986 = vmatprep.subr.bf16.mxu0 %v1923
    %1987 = vmatpush1.bf16.msra.mxu0 %v1922
    %1988 = vmatprep.subr.bf16.mxu0 %v1925
    %1989 = vmatpush1.bf16.msra.mxu0 %v1924
    %1990 = vmatprep.subr.bf16.mxu0 %v1927
    %1991 = vmatpush1.bf16.msra.mxu0 %v1926
    %1992 = vmatprep.subr.bf16.mxu0 %v1929
    %1993 = vmatpush1.bf16.msra.mxu0 %v1928
    %1994 = vmatprep.mubr.bf16.mxu0 %v1751
    %1995 = vmatmul.mubr.bf16.gmra.mrb[0].mxu0 %v1750
    %v1996 = vpop.f32.mrb[0].mxu0
    %v1997 = vadd.f32 %v1795, %v1996
    %v1998 = vpop.f32.mrb[0].mxu0
    %v1999 = vadd.f32 %v1799, %v1998
    %v2000 = vpop.f32.mrb[0].mxu0
    %v2001 = vadd.f32 %v1795, %v2000
    %v2002 = vpop.f32.mrb[0].mxu0
    %v2003 = vadd.f32 %v1799, %v2002
    %2004 = vmatprep.mubr.bf16.mxu0 %v1753
    %2005 = vmatmul.mubr.bf16.gmra.mrb[0].mxu0 %v1752
    %v2006 = vpop.f32.mrb[0].mxu0
    %v2007 = vadd.f32 %v1795, %v2006
    %v2008 = vpop.f32.mrb[0].mxu0
    %v2009 = vadd.f32 %v1799, %v2008
    %v2010 = vpop.f32.mrb[0].mxu0
    %v2011 = vadd.f32 %v1795, %v2010
    %v2012 = vpop.f32.mrb[0].mxu0
    %v2013 = vadd.f32 %v1799, %v2012
    %2014 = vmatprep.mubr.bf16.mxu0 %v1755
    %2015 = vmatmul.mubr.bf16.gmra.mrb[0].mxu0 %v1754
    %v2016 = vpop.f32.mrb[0].mxu0
    %v2017 = vadd.f32 %v1795, %v2016
    %v2018 = vpop.f32.mrb[0].mxu0
    %v2019 = vadd.f32 %v1799, %v2018
    %v2020 = vpop.f32.mrb[0].mxu0
    %v2021 = vadd.f32 %v1795, %v2020
    %v2022 = vpop.f32.mrb[0].mxu0
    %v2023 = vadd.f32 %v1799, %v2022
    %2024 = vmatprep.mubr.bf16.mxu0 %v1757
    %2025 = vmatmul.mubr.bf16.gmra.mrb[0].mxu0 %v1756
    %v2026 = vpop.f32.mrb[0].mxu0
    %v2027 = vadd.f32 %v1795, %v2026
    %v2028 = vpop.f32.mrb[0].mxu0
    %v2029 = vadd.f32 %v1799, %v2028
    %v2030 = vpop.f32.mrb[0].mxu0
    %v2031 = vadd.f32 %v1795, %v2030
    %v2032 = vpop.f32.mrb[0].mxu0
    %v2033 = vadd.f32 %v1799, %v2032
    %2034 = vdwg.mxu0
    %v2035 = vmax.f32 %v1997, 0.0
    %v2036 = vmax.f32 %v1999, 0.0
    %v2037 = vmax.f32 %v2001, 0.0
    %v2038 = vmax.f32 %v2003, 0.0
    %v2039 = vmax.f32 %v2007, 0.0
    %v2040 = vmax.f32 %v2009, 0.0
    %v2041 = vmax.f32 %v2011, 0.0
    %v2042 = vmax.f32 %v2013, 0.0
    %v2043 = vmax.f32 %v2017, 0.0
    %v2044 = vmax.f32 %v2019, 0.0
    %v2045 = vmax.f32 %v2021, 0.0
    %v2046 = vmax.f32 %v2023, 0.0
    %v2047 = vmax.f32 %v2027, 0.0
    %v2048 = vmax.f32 %v2029, 0.0
    %v2049 = vmax.f32 %v2031, 0.0
    %v2050 = vmax.f32 %v2033, 0.0
    %v2051 = vpack.c.bf16 %v2037, %v2035
    %v2052 = vpack.c.bf16 %v2038, %v2036
    %v2053 = vpack.c.bf16 %v2041, %v2039
    %v2054 = vpack.c.bf16 %v2042, %v2040
    %v2055 = vpack.c.bf16 %v2045, %v2043
    %v2056 = vpack.c.bf16 %v2046, %v2044
    %v2057 = vpack.c.bf16 %v2049, %v2047
    %v2058 = vpack.c.bf16 %v2050, %v2048
    %v2059 = vld [vmem:[#allocation16] sm:$0xff]
    %v2060 = vld [vmem:[#allocation16 + $0x8] sm:$0xff]
    %v2061 = vld [vmem:[#allocation16 + $0x10] sm:$0xff]
    %v2062 = vld [vmem:[#allocation16 + $0x18] sm:$0xff]
    %v2063 = vld [vmem:[#allocation16 + $0x20] sm:$0xff]
    %v2064 = vld [vmem:[#allocation16 + $0x28] sm:$0xff]
    %v2065 = vld [vmem:[#allocation16 + $0x30] sm:$0xff]
    %v2066 = vld [vmem:[#allocation16 + $0x38] sm:$0xff]
    %v2067 = vld [vmem:[#allocation16 + $0x40] sm:$0xff]
    %v2068 = vld [vmem:[#allocation16 + $0x48] sm:$0xff]
    %v2069 = vld [vmem:[#allocation16 + $0x50] sm:$0xff]
    %v2070 = vld [vmem:[#allocation16 + $0x58] sm:$0xff]
    %v2071 = vld [vmem:[#allocation16 + $0x60] sm:$0xff]
    %v2072 = vld [vmem:[#allocation16 + $0x68] sm:$0xff]
    %v2073 = vld [vmem:[#allocation16 + $0x70] sm:$0xff]
    %v2074 = vld [vmem:[#allocation16 + $0x78] sm:$0xff]
    %v2075 = vld [vmem:[#allocation16 + $0x80] sm:$0xff]
    %v2076 = vld [vmem:[#allocation16 + $0x88] sm:$0xff]
    %v2077 = vld [vmem:[#allocation16 + $0x90] sm:$0xff]
    %v2078 = vld [vmem:[#allocation16 + $0x98] sm:$0xff]
    %v2079 = vld [vmem:[#allocation16 + $0xa0] sm:$0xff]
    %v2080 = vld [vmem:[#allocation16 + $0xa8] sm:$0xff]
    %v2081 = vld [vmem:[#allocation16 + $0xb0] sm:$0xff]
    %v2082 = vld [vmem:[#allocation16 + $0xb8] sm:$0xff]
    %v2083 = vld [vmem:[#allocation16 + $0xc0] sm:$0xff]
    %v2084 = vld [vmem:[#allocation16 + $0xc8] sm:$0xff]
    %v2085 = vld [vmem:[#allocation16 + $0xd0] sm:$0xff]
    %v2086 = vld [vmem:[#allocation16 + $0xd8] sm:$0xff]
    %v2087 = vld [vmem:[#allocation16 + $0xe0] sm:$0xff]
    %v2088 = vld [vmem:[#allocation16 + $0xe8] sm:$0xff]
    %v2089 = vld [vmem:[#allocation16 + $0xf0] sm:$0xff]
    %v2090 = vld [vmem:[#allocation16 + $0xf8] sm:$0xff]
    %v2091 = vld [vmem:[#allocation5 + $0x13] sm:$0x3]
    %v2093 = vlaneseq
    %v2094 = vshrl.u32 %v2093, 7
    %v2095 = vsub.s32 0, %v2094
    %v2096 = vrot.slane %v2091, %v2095
    %v2097 = vlaneseq
    %v2098 = vshrl.u32 %v2097, 7
    %v2099 = vsub.s32 1, %v2098
    %v2100 = vrot.slane %v2091, %v2099
    %v2135 = vunpack.c.l.b16 %v2059
    %v2136 = vunpack.c.h.b16 %v2059
    %v2137 = vunpack.c.l.b16 %v2060
    %v2138 = vunpack.c.h.b16 %v2060
    %v2139 = vunpack.c.l.b16 %v2061
    %v2140 = vunpack.c.h.b16 %v2061
    %v2141 = vunpack.c.l.b16 %v2062
    %v2142 = vunpack.c.h.b16 %v2062
    %v2143 = vunpack.c.l.b16 %v2063
    %v2144 = vunpack.c.h.b16 %v2063
    %v2145 = vunpack.c.l.b16 %v2064
    %v2146 = vunpack.c.h.b16 %v2064
    %v2147 = vunpack.c.l.b16 %v2065
    %v2148 = vunpack.c.h.b16 %v2065
    %v2149 = vunpack.c.l.b16 %v2066
    %v2150 = vunpack.c.h.b16 %v2066
    %v2151 = vunpack.c.l.b16 %v2067
    %v2152 = vunpack.c.h.b16 %v2067
    %v2153 = vunpack.c.l.b16 %v2068
    %v2154 = vunpack.c.h.b16 %v2068
    %v2155 = vunpack.c.l.b16 %v2069
    %v2156 = vunpack.c.h.b16 %v2069
    %v2157 = vunpack.c.l.b16 %v2070
    %v2158 = vunpack.c.h.b16 %v2070
    %v2159 = vunpack.c.l.b16 %v2071
    %v2160 = vunpack.c.h.b16 %v2071
    %v2161 = vunpack.c.l.b16 %v2072
    %v2162 = vunpack.c.h.b16 %v2072
    %v2163 = vunpack.c.l.b16 %v2073
    %v2164 = vunpack.c.h.b16 %v2073
    %v2165 = vunpack.c.l.b16 %v2074
    %v2166 = vunpack.c.h.b16 %v2074
    %v2167 = vunpack.c.l.b16 %v2075
    %v2168 = vunpack.c.h.b16 %v2075
    %v2169 = vunpack.c.l.b16 %v2076
    %v2170 = vunpack.c.h.b16 %v2076
    %v2171 = vunpack.c.l.b16 %v2077
    %v2172 = vunpack.c.h.b16 %v2077
    %v2173 = vunpack.c.l.b16 %v2078
    %v2174 = vunpack.c.h.b16 %v2078
    %v2175 = vunpack.c.l.b16 %v2079
    %v2176 = vunpack.c.h.b16 %v2079
    %v2177 = vunpack.c.l.b16 %v2080
    %v2178 = vunpack.c.h.b16 %v2080
    %v2179 = vunpack.c.l.b16 %v2081
    %v2180 = vunpack.c.h.b16 %v2081
    %v2181 = vunpack.c.l.b16 %v2082
    %v2182 = vunpack.c.h.b16 %v2082
    %v2183 = vunpack.c.l.b16 %v2083
    %v2184 = vunpack.c.h.b16 %v2083
    %v2185 = vunpack.c.l.b16 %v2084
    %v2186 = vunpack.c.h.b16 %v2084
    %v2187 = vunpack.c.l.b16 %v2085
    %v2188 = vunpack.c.h.b16 %v2085
    %v2189 = vunpack.c.l.b16 %v2086
    %v2190 = vunpack.c.h.b16 %v2086
    %v2191 = vunpack.c.l.b16 %v2087
    %v2192 = vunpack.c.h.b16 %v2087
    %v2193 = vunpack.c.l.b16 %v2088
    %v2194 = vunpack.c.h.b16 %v2088
    %v2195 = vunpack.c.l.b16 %v2089
    %v2196 = vunpack.c.h.b16 %v2089
    %v2197 = vunpack.c.l.b16 %v2090
    %v2198 = vunpack.c.h.b16 %v2090
    %v2199 = vpack.c.b16 %v2137, %v2135
    %v2200 = vpack.c.b16 %v2138, %v2136
    %v2201 = vpack.c.b16 %v2141, %v2139
    %v2202 = vpack.c.b16 %v2142, %v2140
    %v2203 = vpack.c.b16 %v2145, %v2143
    %v2204 = vpack.c.b16 %v2146, %v2144
    %v2205 = vpack.c.b16 %v2149, %v2147
    %v2206 = vpack.c.b16 %v2150, %v2148
    %v2207 = vpack.c.b16 %v2153, %v2151
    %v2208 = vpack.c.b16 %v2154, %v2152
    %v2209 = vpack.c.b16 %v2157, %v2155
    %v2210 = vpack.c.b16 %v2158, %v2156
    %v2211 = vpack.c.b16 %v2161, %v2159
    %v2212 = vpack.c.b16 %v2162, %v2160
    %v2213 = vpack.c.b16 %v2165, %v2163
    %v2214 = vpack.c.b16 %v2166, %v2164
    %v2215 = vpack.c.b16 %v2169, %v2167
    %v2216 = vpack.c.b16 %v2170, %v2168
    %v2217 = vpack.c.b16 %v2173, %v2171
    %v2218 = vpack.c.b16 %v2174, %v2172
    %v2219 = vpack.c.b16 %v2177, %v2175
    %v2220 = vpack.c.b16 %v2178, %v2176
    %v2221 = vpack.c.b16 %v2181, %v2179
    %v2222 = vpack.c.b16 %v2182, %v2180
    %v2223 = vpack.c.b16 %v2185, %v2183
    %v2224 = vpack.c.b16 %v2186, %v2184
    %v2225 = vpack.c.b16 %v2189, %v2187
    %v2226 = vpack.c.b16 %v2190, %v2188
    %v2227 = vpack.c.b16 %v2193, %v2191
    %v2228 = vpack.c.b16 %v2194, %v2192
    %v2229 = vpack.c.b16 %v2197, %v2195
    %v2230 = vpack.c.b16 %v2198, %v2196
    %2263 = vmatprep.subr.bf16.mxu0 %v2200
    %2264 = vmatpush1.bf16.msra.mxu0 %v2199
    %2265 = vmatprep.subr.bf16.mxu0 %v2202
    %2266 = vmatpush1.bf16.msra.mxu0 %v2201
    %2267 = vmatprep.subr.bf16.mxu0 %v2204
    %2268 = vmatpush1.bf16.msra.mxu0 %v2203
    %2269 = vmatprep.subr.bf16.mxu0 %v2206
    %2270 = vmatpush1.bf16.msra.mxu0 %v2205
    %2271 = vmatprep.subr.bf16.mxu0 %v2208
    %2272 = vmatpush1.bf16.msra.mxu0 %v2207
    %2273 = vmatprep.subr.bf16.mxu0 %v2210
    %2274 = vmatpush1.bf16.msra.mxu0 %v2209
    %2275 = vmatprep.subr.bf16.mxu0 %v2212
    %2276 = vmatpush1.bf16.msra.mxu0 %v2211
    %2277 = vmatprep.subr.bf16.mxu0 %v2214
    %2278 = vmatpush1.bf16.msra.mxu0 %v2213
    %2279 = vmatprep.subr.bf16.mxu0 %v2216
    %2280 = vmatpush1.bf16.msra.mxu0 %v2215
    %2281 = vmatprep.subr.bf16.mxu0 %v2218
    %2282 = vmatpush1.bf16.msra.mxu0 %v2217
    %2283 = vmatprep.subr.bf16.mxu0 %v2220
    %2284 = vmatpush1.bf16.msra.mxu0 %v2219
    %2285 = vmatprep.subr.bf16.mxu0 %v2222
    %2286 = vmatpush1.bf16.msra.mxu0 %v2221
    %2287 = vmatprep.subr.bf16.mxu0 %v2224
    %2288 = vmatpush1.bf16.msra.mxu0 %v2223
    %2289 = vmatprep.subr.bf16.mxu0 %v2226
    %2290 = vmatpush1.bf16.msra.mxu0 %v2225
    %2291 = vmatprep.subr.bf16.mxu0 %v2228
    %2292 = vmatpush1.bf16.msra.mxu0 %v2227
    %2293 = vmatprep.subr.bf16.mxu0 %v2230
    %2294 = vmatpush1.bf16.msra.mxu0 %v2229
    %2295 = vmatprep.mubr.bf16.mxu0 %v2052
    %2296 = vmatmul.mubr.bf16.gmra.mrb[0].mxu0 %v2051
    %v2297 = vpop.f32.mrb[0].mxu0
    %v2298 = vadd.f32 %v2096, %v2297
    %v2299 = vpop.f32.mrb[0].mxu0
    %v2300 = vadd.f32 %v2100, %v2299
    %v2301 = vpop.f32.mrb[0].mxu0
    %v2302 = vadd.f32 %v2096, %v2301
    %v2303 = vpop.f32.mrb[0].mxu0
    %v2304 = vadd.f32 %v2100, %v2303
    %2305 = vmatprep.mubr.bf16.mxu0 %v2054
    %2306 = vmatmul.mubr.bf16.gmra.mrb[0].mxu0 %v2053
    %v2307 = vpop.f32.mrb[0].mxu0
    %v2308 = vadd.f32 %v2096, %v2307
    %v2309 = vpop.f32.mrb[0].mxu0
    %v2310 = vadd.f32 %v2100, %v2309
    %v2311 = vpop.f32.mrb[0].mxu0
    %v2312 = vadd.f32 %v2096, %v2311
    %v2313 = vpop.f32.mrb[0].mxu0
    %v2314 = vadd.f32 %v2100, %v2313
    %2315 = vmatprep.mubr.bf16.mxu0 %v2056
    %2316 = vmatmul.mubr.bf16.gmra.mrb[0].mxu0 %v2055
    %v2317 = vpop.f32.mrb[0].mxu0
    %v2318 = vadd.f32 %v2096, %v2317
    %v2319 = vpop.f32.mrb[0].mxu0
    %v2320 = vadd.f32 %v2100, %v2319
    %v2321 = vpop.f32.mrb[0].mxu0
    %v2322 = vadd.f32 %v2096, %v2321
    %v2323 = vpop.f32.mrb[0].mxu0
    %v2324 = vadd.f32 %v2100, %v2323
    %2325 = vmatprep.mubr.bf16.mxu0 %v2058
    %2326 = vmatmul.mubr.bf16.gmra.mrb[0].mxu0 %v2057
    %v2327 = vpop.f32.mrb[0].mxu0
    %v2328 = vadd.f32 %v2096, %v2327
    %v2329 = vpop.f32.mrb[0].mxu0
    %v2330 = vadd.f32 %v2100, %v2329
    %v2331 = vpop.f32.mrb[0].mxu0
    %v2332 = vadd.f32 %v2096, %v2331
    %v2333 = vpop.f32.mrb[0].mxu0
    %v2334 = vadd.f32 %v2100, %v2333
    %2335 = vdwg.mxu0
    %v2336 = vmax.f32 %v2298, 0.0
    %v2337 = vmax.f32 %v2300, 0.0
    %v2338 = vmax.f32 %v2302, 0.0
    %v2339 = vmax.f32 %v2304, 0.0
    %v2340 = vmax.f32 %v2308, 0.0
    %v2341 = vmax.f32 %v2310, 0.0
    %v2342 = vmax.f32 %v2312, 0.0
    %v2343 = vmax.f32 %v2314, 0.0
    %v2344 = vmax.f32 %v2318, 0.0
    %v2345 = vmax.f32 %v2320, 0.0
    %v2346 = vmax.f32 %v2322, 0.0
    %v2347 = vmax.f32 %v2324, 0.0
    %v2348 = vmax.f32 %v2328, 0.0
    %v2349 = vmax.f32 %v2330, 0.0
    %v2350 = vmax.f32 %v2332, 0.0
    %v2351 = vmax.f32 %v2334, 0.0
    %v2352 = vpack.c.bf16 %v2338, %v2336
    %v2353 = vpack.c.bf16 %v2339, %v2337
    %v2354 = vpack.c.bf16 %v2342, %v2340
    %v2355 = vpack.c.bf16 %v2343, %v2341
    %v2356 = vpack.c.bf16 %v2346, %v2344
    %v2357 = vpack.c.bf16 %v2347, %v2345
    %v2358 = vpack.c.bf16 %v2350, %v2348
    %v2359 = vpack.c.bf16 %v2351, %v2349
    %v2360 = vld [vmem:[#allocation17] sm:$0xf]
    %v2361 = vld [vmem:[#allocation17 + $0x4] sm:$0xf]
    %v2362 = vld [vmem:[#allocation17 + $0x8] sm:$0xf]
    %v2363 = vld [vmem:[#allocation17 + $0xc] sm:$0xf]
    %v2364 = vld [vmem:[#allocation17 + $0x10] sm:$0xf]
    %v2365 = vld [vmem:[#allocation17 + $0x14] sm:$0xf]
    %v2366 = vld [vmem:[#allocation17 + $0x18] sm:$0xf]
    %v2367 = vld [vmem:[#allocation17 + $0x1c] sm:$0xf]
    %v2368 = vld [vmem:[#allocation17 + $0x20] sm:$0xf]
    %v2369 = vld [vmem:[#allocation17 + $0x24] sm:$0xf]
    %v2370 = vld [vmem:[#allocation17 + $0x28] sm:$0xf]
    %v2371 = vld [vmem:[#allocation17 + $0x2c] sm:$0xf]
    %v2372 = vld [vmem:[#allocation17 + $0x30] sm:$0xf]
    %v2373 = vld [vmem:[#allocation17 + $0x34] sm:$0xf]
    %v2374 = vld [vmem:[#allocation17 + $0x38] sm:$0xf]
    %v2375 = vld [vmem:[#allocation17 + $0x3c] sm:$0xf]
    %v2376 = vld [vmem:[#allocation17 + $0x40] sm:$0xf]
    %v2377 = vld [vmem:[#allocation17 + $0x44] sm:$0xf]
    %v2378 = vld [vmem:[#allocation17 + $0x48] sm:$0xf]
    %v2379 = vld [vmem:[#allocation17 + $0x4c] sm:$0xf]
    %v2380 = vld [vmem:[#allocation17 + $0x50] sm:$0xf]
    %v2381 = vld [vmem:[#allocation17 + $0x54] sm:$0xf]
    %v2382 = vld [vmem:[#allocation17 + $0x58] sm:$0xf]
    %v2383 = vld [vmem:[#allocation17 + $0x5c] sm:$0xf]
    %v2384 = vld [vmem:[#allocation17 + $0x60] sm:$0xf]
    %v2385 = vld [vmem:[#allocation17 + $0x64] sm:$0xf]
    %v2386 = vld [vmem:[#allocation17 + $0x68] sm:$0xf]
    %v2387 = vld [vmem:[#allocation17 + $0x6c] sm:$0xf]
    %v2388 = vld [vmem:[#allocation17 + $0x70] sm:$0xf]
    %v2389 = vld [vmem:[#allocation17 + $0x74] sm:$0xf]
    %v2390 = vld [vmem:[#allocation17 + $0x78] sm:$0xf]
    %v2391 = vld [vmem:[#allocation17 + $0x7c] sm:$0xf]
    %v2392 = vld [vmem:[#allocation5 + $0x15] sm:$0x1]
    %v2394 = vlaneseq
    %v2395 = vshrl.u32 %v2394, 7
    %v2396 = vsub.s32 0, %v2395
    %v2397 = vrot.slane %v2392, %v2396
    %v2431 = vunpack.c.l.b16 %v2360
    %v2432 = vunpack.c.l.b16 %v2361
    %v2433 = vunpack.c.l.b16 %v2362
    %v2434 = vunpack.c.l.b16 %v2363
    %v2435 = vunpack.c.l.b16 %v2364
    %v2436 = vunpack.c.l.b16 %v2365
    %v2437 = vunpack.c.l.b16 %v2366
    %v2438 = vunpack.c.l.b16 %v2367
    %v2439 = vunpack.c.l.b16 %v2368
    %v2440 = vunpack.c.l.b16 %v2369
    %v2441 = vunpack.c.l.b16 %v2370
    %v2442 = vunpack.c.l.b16 %v2371
    %v2443 = vunpack.c.l.b16 %v2372
    %v2444 = vunpack.c.l.b16 %v2373
    %v2445 = vunpack.c.l.b16 %v2374
    %v2446 = vunpack.c.l.b16 %v2375
    %v2447 = vunpack.c.l.b16 %v2376
    %v2448 = vunpack.c.l.b16 %v2377
    %v2449 = vunpack.c.l.b16 %v2378
    %v2450 = vunpack.c.l.b16 %v2379
    %v2451 = vunpack.c.l.b16 %v2380
    %v2452 = vunpack.c.l.b16 %v2381
    %v2453 = vunpack.c.l.b16 %v2382
    %v2454 = vunpack.c.l.b16 %v2383
    %v2455 = vunpack.c.l.b16 %v2384
    %v2456 = vunpack.c.l.b16 %v2385
    %v2457 = vunpack.c.l.b16 %v2386
    %v2458 = vunpack.c.l.b16 %v2387
    %v2459 = vunpack.c.l.b16 %v2388
    %v2460 = vunpack.c.l.b16 %v2389
    %v2461 = vunpack.c.l.b16 %v2390
    %v2462 = vunpack.c.l.b16 %v2391
    %v2463 = vpack.c.b16 %v2432, %v2431
    %v2464 = vpack.c.b16 %v2434, %v2433
    %v2465 = vpack.c.b16 %v2436, %v2435
    %v2466 = vpack.c.b16 %v2438, %v2437
    %v2467 = vpack.c.b16 %v2440, %v2439
    %v2468 = vpack.c.b16 %v2442, %v2441
    %v2469 = vpack.c.b16 %v2444, %v2443
    %v2470 = vpack.c.b16 %v2446, %v2445
    %v2471 = vpack.c.b16 %v2448, %v2447
    %v2472 = vpack.c.b16 %v2450, %v2449
    %v2473 = vpack.c.b16 %v2452, %v2451
    %v2474 = vpack.c.b16 %v2454, %v2453
    %v2475 = vpack.c.b16 %v2456, %v2455
    %v2476 = vpack.c.b16 %v2458, %v2457
    %v2477 = vpack.c.b16 %v2460, %v2459
    %v2478 = vpack.c.b16 %v2462, %v2461
    %2495 = vmatprep.subr.bf16.mxu0 0
    %2496 = vmatpush1.bf16.msra.mxu0 %v2463
    %2497 = vmatprep.subr.bf16.mxu0 0
    %2498 = vmatpush1.bf16.msra.mxu0 %v2464
    %2499 = vmatprep.subr.bf16.mxu0 0
    %2500 = vmatpush1.bf16.msra.mxu0 %v2465
    %2501 = vmatprep.subr.bf16.mxu0 0
    %2502 = vmatpush1.bf16.msra.mxu0 %v2466
    %2503 = vmatprep.subr.bf16.mxu0 0
    %2504 = vmatpush1.bf16.msra.mxu0 %v2467
    %2505 = vmatprep.subr.bf16.mxu0 0
    %2506 = vmatpush1.bf16.msra.mxu0 %v2468
    %2507 = vmatprep.subr.bf16.mxu0 0
    %2508 = vmatpush1.bf16.msra.mxu0 %v2469
    %2509 = vmatprep.subr.bf16.mxu0 0
    %2510 = vmatpush1.bf16.msra.mxu0 %v2470
    %2511 = vmatprep.subr.bf16.mxu0 0
    %2512 = vmatpush1.bf16.msra.mxu0 %v2471
    %2513 = vmatprep.subr.bf16.mxu0 0
    %2514 = vmatpush1.bf16.msra.mxu0 %v2472
    %2515 = vmatprep.subr.bf16.mxu0 0
    %2516 = vmatpush1.bf16.msra.mxu0 %v2473
    %2517 = vmatprep.subr.bf16.mxu0 0
    %2518 = vmatpush1.bf16.msra.mxu0 %v2474
    %2519 = vmatprep.subr.bf16.mxu0 0
    %2520 = vmatpush1.bf16.msra.mxu0 %v2475
    %2521 = vmatprep.subr.bf16.mxu0 0
    %2522 = vmatpush1.bf16.msra.mxu0 %v2476
    %2523 = vmatprep.subr.bf16.mxu0 0
    %2524 = vmatpush1.bf16.msra.mxu0 %v2477
    %2525 = vmatprep.subr.bf16.mxu0 0
    %2526 = vmatpush1.bf16.msra.mxu0 %v2478
    %2527 = vmatprep.mubr.bf16.mxu0 %v2353
    %2528 = vmatmul.mubr.bf16.gmra.mrb[0].mxu0 %v2352
    %v2529 = vpop.f32.mrb[0].mxu0
    %v2530 = vadd.f32 %v2397, %v2529
    %v2531 = vpop.f32.mrb[0].mxu0
    %v2532 = vpop.f32.mrb[0].mxu0
    %v2533 = vadd.f32 %v2397, %v2532
    %v2534 = vpop.f32.mrb[0].mxu0
    %2535 = vmatprep.mubr.bf16.mxu0 %v2355
    %2536 = vmatmul.mubr.bf16.gmra.mrb[0].mxu0 %v2354
    %v2537 = vpop.f32.mrb[0].mxu0
    %v2538 = vadd.f32 %v2397, %v2537
    %v2539 = vpop.f32.mrb[0].mxu0
    %v2540 = vpop.f32.mrb[0].mxu0
    %v2541 = vadd.f32 %v2397, %v2540
    %v2542 = vpop.f32.mrb[0].mxu0
    %2543 = vmatprep.mubr.bf16.mxu0 %v2357
    %2544 = vmatmul.mubr.bf16.gmra.mrb[0].mxu0 %v2356
    %v2545 = vpop.f32.mrb[0].mxu0
    %v2546 = vadd.f32 %v2397, %v2545
    %v2547 = vpop.f32.mrb[0].mxu0
    %v2548 = vpop.f32.mrb[0].mxu0
    %v2549 = vadd.f32 %v2397, %v2548
    %v2550 = vpop.f32.mrb[0].mxu0
    %2551 = vmatprep.mubr.bf16.mxu0 %v2359
    %2552 = vmatmul.mubr.bf16.gmra.mrb[0].mxu0 %v2358
    %v2553 = vpop.f32.mrb[0].mxu0
    %v2554 = vadd.f32 %v2397, %v2553
    %v2555 = vpop.f32.mrb[0].mxu0
    %v2556 = vpop.f32.mrb[0].mxu0
    %v2557 = vadd.f32 %v2397, %v2556
    %v2558 = vpop.f32.mrb[0].mxu0
    %2559 = vdwg.mxu0
    %2560 = vst [vmem:[#allocation19] sm:$0xff] %v2530
    %2561 = vst [vmem:[#allocation19 + $0x8] sm:$0xff] %v2533
    %2562 = vst [vmem:[#allocation19 + $0x10] sm:$0xff] %v2538
    %2563 = vst [vmem:[#allocation19 + $0x18] sm:$0xff] %v2541
    %2564 = vst [vmem:[#allocation19 + $0x20] sm:$0xff] %v2546
    %2565 = vst [vmem:[#allocation19 + $0x28] sm:$0xff] %v2549
    %2566 = vst [vmem:[#allocation19 + $0x30] sm:$0xff] %v2554
    %2567 = vst [vmem:[#allocation19 + $0x38] sm:$0xff] %v2557
    // Predicated region
    $region82: #{tpu_custom_call.1} parent=1 // pred_check
      _
    $region83: #{tpu_custom_call.1} parent=1 // pred_check_branch
      %2569 = sbr.rel (0) target = $region85
    $region84: #{tpu_custom_call.1} parent=1 // pred_region
      %s2571 = ssub.s32 1024, 1024
      %2572 = vsyncadd [#allocation4], %s2571
      %s2573 = sshll.u32 [#allocation19], 4
      %s2574 = int_to_ptr.vmem [resolvable:$true] %s2573
      %2579 = dma.vmem_to_hbm [thread:$0]  %s2574, 1024, %s10, [#allocation4], 128, 128, 8
    $region85: #{tpu_custom_call.1} parent=1 // pred_fallthru
      _
    // Predicated region
    $region86: #{tpu_custom_call.1} parent=1 // pred_check
      _
    $region87: #{tpu_custom_call.1} parent=1 // pred_check_branch
      %2581 = sbr.rel (0) target = $region89
    $region88: #{tpu_custom_call.1} parent=1 // pred_region
      %2582 = dma.done [#allocation4], 1024
    $region89: #{tpu_custom_call.1} parent=1 // pred_fallthru
      _
    %2583 = vsyncpa [#allocation3], 1
    %2584 = vsyncpa [#allocation6], 1
    %2585 = vsyncpa [#allocation9], 1
    %2586 = vsyncpa [#allocation12], 1
    %2587 = vsyncpa [#allocation15], 1
    %2588 = vsyncpa [#allocation18], 1
    %2589 = vsyncpa [#allocation4], 1

</llo_original>
